<compile_context>
chip_gen: v6e
topology: v6e:2x2x1
jax: 0.10.0
libtpu: 0.0.40
codegen_flags: <defaults>
</compile_context>

<pallas_src>
import functools

import jax
import jax.numpy as jnp
from jax import lax
from jax.experimental import pallas as pl
from jax.experimental.pallas import tpu as pltpu


# ------------------------------ Pallas kernel ------------------------------ #

def _evolve_layer_kernel(perm_ref, vals_ref, x_ref, a_ref, w0_ref,
                         wih_ref, whh_ref, bih_ref, bhh_ref,
                         out_ref, w_scr):
    """One EvolveGCNH layer for one history step t; W carried in VMEM scratch.

    perm_ref : (1, k, 1) int32   top-k node indices (descending score)
    vals_ref : (1, k, 1) f32     tanh scores of the selected nodes
    x_ref    : (1, N, C) f32     node features of step t
    a_ref    : (1, N, N) f32     GCN-normalised adjacency (resident if shared)
    w0_ref   : (C, H)    f32     initial GCN weight
    wih/whh  : (3, C, H)/(3, H, H)  GRU gate weights, leading gate axis (r,z,n)
    bih/bhh  : (3, 1, H)         GRU gate biases
    out_ref  : (1, N, H)         GCN output of step t
    w_scr    : (C, H)            evolved weight, persists across the T grid
    """
    t = pl.program_id(0)

    @pl.when(t == 0)
    def _():
        w_scr[...] = w0_ref[...]

    x = x_ref[0]                       # (N, C)
    a = a_ref[0]                       # (N, N)

    # Independent of the GRU -> issue first so the MXU work overlaps the GRU's
    # sigmoid/tanh (EUP) chain.   (A_hat @ X) @ W' ordering.
    ax = jnp.dot(a, x, preferred_element_type=jnp.float32)          # (N, C)

    # In-kernel top-k gather + score scaling as a scaled one-hot matmul:
    #   sel[i, j] = vals[i] * (j == perm[i])   ->   x_tilde = sel @ X
    k = perm_ref.shape[1]
    n = x.shape[0]
    col = lax.broadcasted_iota(jnp.int32, (k, n), 1)
    sel = jnp.where(col == perm_ref[0], vals_ref[0], 0.0)            # (k, N)
    x_tilde = jnp.dot(sel, x, preferred_element_type=jnp.float32)    # (k, C)

    # Matrix GRU: rows of W are the "batch"; one whole-tile matmul per gate
    # (no lane sub-slicing of a concatenated (I, 3H) gate tensor).
    h = w_scr[...]                                                   # (C, H)

    def gate(g):
        gi = jnp.dot(x_tilde, wih_ref[g],
                     preferred_element_type=jnp.float32) + bih_ref[g]
        gh = jnp.dot(h, whh_ref[g],
                     preferred_element_type=jnp.float32) + bhh_ref[g]
        return gi, gh

    gi_r, gh_r = gate(0)
    gi_z, gh_z = gate(1)
    gi_n, gh_n = gate(2)
    r = jax.nn.sigmoid(gi_r + gh_r)
    z = jax.nn.sigmoid(gi_z + gh_z)
    c = jnp.tanh(gi_n + r * gh_n)
    w_new = (1.0 - z) * c + z * h
    w_scr[...] = w_new

    # GCN with the evolved weight; only this matmul depends on the GRU result.
    out_ref[0] = jnp.dot(ax, w_new, preferred_element_type=jnp.float32)


# ----------------------------- kernel wrapper ------------------------------ #

def evolve_gcnh_all_steps(x_all, a_all, params, *, last_only=False):
    """Run one EvolveGCNH layer over all T history steps in ONE pallas_call.

    x_all : (T, N, C) node features per step
    a_all : (1, N, N) shared normalised adjacency (kept resident in VMEM) or
            (T, N, N) per-step adjacency
    Returns (T, N, H) outputs, or (1, N, H) (last step only) if last_only.
    """
    T, N, C = x_all.shape
    H = params["W0"].shape[1]
    k = C  # TopKPooling keeps in_channels nodes

    # TopKPooling scores + selection stay in plain JAX (fuse inside the jit);
    # no clean Pallas/Mosaic equivalent of top_k.
    scores = jnp.tanh(x_all @ params["p_scaled"])                    # (T, N)
    vals, perm = lax.top_k(scores, k)                                # (T, k)
    perm = perm.astype(jnp.int32)[..., None]                         # (T, k, 1)
    vals = vals.astype(jnp.float32)[..., None]                       # (T, k, 1)

    if a_all.shape[0] == 1:
        a_map = lambda t: (0, 0, 0)          # constant block -> resident A_hat
    else:
        a_map = lambda t: (t, 0, 0)

    if last_only:
        out_T = 1
        out_map = lambda t: (0, 0, 0)        # overwritten each step; last wins
    else:
        out_T = T
        out_map = lambda t: (t, 0, 0)

    grid_spec = pltpu.PrefetchScalarGridSpec(
        num_scalar_prefetch=0,
        grid=(T,),
        in_specs=[
            pl.BlockSpec((1, k, 1), lambda t: (t, 0, 0)),            # perm
            pl.BlockSpec((1, k, 1), lambda t: (t, 0, 0)),            # vals
            pl.BlockSpec((1, N, C), lambda t: (t, 0, 0)),            # x
            pl.BlockSpec((1, N, N), a_map),                          # a_hat
            pl.BlockSpec((C, H), lambda t: (0, 0)),                  # W0
            pl.BlockSpec((3, C, H), lambda t: (0, 0, 0)),            # w_ih
            pl.BlockSpec((3, H, H), lambda t: (0, 0, 0)),            # w_hh
            pl.BlockSpec((3, 1, H), lambda t: (0, 0, 0)),            # b_ih
            pl.BlockSpec((3, 1, H), lambda t: (0, 0, 0)),            # b_hh
        ],
        out_specs=pl.BlockSpec((1, N, H), out_map),
        scratch_shapes=[pltpu.VMEM((C, H), jnp.float32)],            # evolved W
    )

    return pl.pallas_call(
        _evolve_layer_kernel,
        out_shape=jax.ShapeDtypeStruct((out_T, N, H), jnp.float32),
        grid_spec=grid_spec,
        compiler_params=pltpu.CompilerParams(
            dimension_semantics=("arbitrary",)),     # W carries across steps
    )(perm, vals, x_all, a_all, params["W0"], params["w_ih"], params["w_hh"],
      params["b_ih"], params["b_hh"])


# ------------------------------- model glue -------------------------------- #

def normalized_adjacency(edge_index, n):
    """Dense GCN-normalised adjacency with self loops: D^-1/2 (A + I) D^-1/2."""
    src, dst = edge_index[0], edge_index[1]
    a = jnp.zeros((n, n), jnp.float32).at[dst, src].add(1.0)  # duplicate edges sum
    a = a + jnp.eye(n, dtype=jnp.float32)
    deg = jnp.sum(a, axis=1)
    d_inv_sqrt = lax.rsqrt(jnp.maximum(deg, 1e-12))
    return a * d_inv_sqrt[:, None] * d_inv_sqrt[None, :]


def init_evolve_gcnh(key, c_in, c_out):
    """EvolveGCNH(num_nodes, c_in, c_out) parameters (deterministic init)."""
    k1, k2, k3, k4, k5, k6 = jax.random.split(key, 6)
    s = 1.0 / jnp.sqrt(jnp.float32(c_out))
    p = jax.random.normal(k2, (c_in,), jnp.float32) * 0.1
    return dict(
        # initial GCN weight
        W0=jax.random.uniform(k1, (c_in, c_out), jnp.float32, -s, s),
        # TopKPooling score vector, pre-scaled by 1/||p|| once (constant)
        p_scaled=p / jnp.linalg.norm(p),
        # GRU gate weights with a leading gate axis (r, z, n): each gate is a
        # whole-tile index inside the kernel -> no lane sub-slicing.
        w_ih=jax.random.uniform(k3, (3, c_in, c_out), jnp.float32, -s, s),
        w_hh=jax.random.uniform(k4, (3, c_out, c_out), jnp.float32, -s, s),
        b_ih=jax.random.uniform(k5, (3, 1, c_out), jnp.float32, -s, s),
        b_hh=jax.random.uniform(k6, (3, 1, c_out), jnp.float32, -s, s),
    )


@functools.partial(jax.jit, static_argnames=("num_nodes",))
def double_layer_forward(params1, params2, x_all, edge_index, num_nodes):
    """DoubleLayerModel.forward over the history; returns the last output.

    x_all      : (T, N, C_in) stacked node-feature snapshots
    edge_index : (2, E) shared topology (adjacency built once, hoisted out of
                 the T loop) or (T, 2, E) per-step topologies (one batched build)
    """
    if edge_index.ndim == 2:
        a_all = normalized_adjacency(edge_index, num_nodes)[None]    # (1, N, N)
    else:
        a_all = jax.vmap(lambda e: normalized_adjacency(e, num_nodes))(edge_index)

    hidden = evolve_gcnh_all_steps(x_all, a_all, params1)            # (T, N, Chid)
    out = evolve_gcnh_all_steps(hidden, a_all, params2, last_only=True)
    return out[0]                                                    # (N, C_out)


# ---------------------------------- main ----------------------------------- #

if __name__ == "__main__":
    N = 32             # node_count
    C_IN = 8           # in_channels
    C_HID = 16         # args.hidden_channels
    C_OUT = 8          # args.out_channels
    T = 3              # args.num_hist_steps
    HIDDEN_FEATS = 32  # args.hidden_feats (classifier, unused in forward)

    key = jax.random.PRNGKey(0)
    kp1, kp2, kc1, kc2, kx = jax.random.split(key, 5)

    params1 = init_evolve_gcnh(kp1, C_IN, C_HID)
    params2 = init_evolve_gcnh(kp2, C_HID, C_OUT)

    # Classifier params (Linear(2*C_OUT -> HIDDEN_FEATS), ReLU, Linear(-> 2)):
    # initialised for parity with the torch module; DoubleLayerModel.forward
    # never calls the classifier, so they are unused here.
    _cls_w1 = jax.random.normal(kc1, (2 * C_OUT, HIDDEN_FEATS), jnp.float32) * 0.1
    _cls_w2 = jax.random.normal(kc2, (HIDDEN_FEATS, 2), jnp.float32) * 0.1

    # Deterministic small graph: symmetric ring (shared across history steps).
    src = jnp.arange(N, dtype=jnp.int32)
    dst = (src + 1) % N
    edge_index = jnp.stack(
        [jnp.concatenate([src, dst]), jnp.concatenate([dst, src])], axis=0
    )  # (2, 2N)

    # One feature snapshot per history step (same topology, new node features).
    x_all = jnp.stack([
        jax.random.normal(jax.random.fold_in(kx, t), (N, C_IN), jnp.float32)
        for t in range(T)
    ])  # (T, N, C_IN)
    assert x_all.shape[0] == T  # mirrors the torch forward's num_hist_steps assert

    out = double_layer_forward(params1, params2, x_all, edge_index, num_nodes=N)
    out = jax.block_until_ready(out)
    assert out.shape == (N, C_OUT) and out.dtype == jnp.float32
    assert bool(jnp.all(jnp.isfinite(out)))
    print("KERNEL_OK")
</pallas_src>

<mosaic_0001>
module attributes {stable_mosaic.version = 11 : i64} {
  func.func private @main(%arg0: i32) attributes {dimension_semantics = [#tpu.dimension_semantics<core_parallel>], iteration_bounds = array<i64: 2>, tpu.core_type = #tpu.core_type<sc_scalar_subcore>, window_params = []} {
    return
  }
}

module attributes {stable_mosaic.version = 11 : i64} {
  func.func private @main(%arg0: i32) attributes {dimension_semantics = [#tpu.dimension_semantics<core_parallel>], iteration_bounds = array<i64: 2>, tpu.core_type = #tpu.core_type<sc_scalar_subcore>, window_params = []} {
    return
  }
}

module attributes {stable_mosaic.version = 11 : i64} {
  func.func @_evolve_layer_kernel(%arg0: i32, %arg1: memref<1x8x1xi32, #tpu.memory_space<vmem>>, %arg2: memref<1x8x1xf32, #tpu.memory_space<vmem>>, %arg3: memref<1x32x8xf32, #tpu.memory_space<vmem>>, %arg4: memref<1x32x32xf32, #tpu.memory_space<vmem>>, %arg5: memref<8x16xf32, #tpu.memory_space<vmem>>, %arg6: memref<3x8x16xf32, #tpu.memory_space<vmem>>, %arg7: memref<3x16x16xf32, #tpu.memory_space<vmem>>, %arg8: memref<3x1x16xf32, #tpu.memory_space<vmem>>, %arg9: memref<3x1x16xf32, #tpu.memory_space<vmem>>, %arg10: memref<1x32x16xf32, #tpu.memory_space<vmem>>, %arg11: memref<8x16xf32, #tpu.memory_space<vmem>>) attributes {dimension_semantics = [#tpu.dimension_semantics<arbitrary>], iteration_bounds = array<i64: 3>, scalar_prefetch = 0 : i64, scratch_operands = 1 : i64, tpu.core_type = #tpu.core_type<tc>, window_params = [{transform_indices = @transform_0, window_bounds = array<i64: 1, 8, 1>}, {transform_indices = @transform_1, window_bounds = array<i64: 1, 8, 1>}, {transform_indices = @transform_2, window_bounds = array<i64: 1, 32, 8>}, {pipeline_mode = #tpu.pipeline_mode<synchronous>, transform_indices = @transform_3, window_bounds = array<i64: 1, 32, 32>}, {pipeline_mode = #tpu.pipeline_mode<synchronous>, transform_indices = @transform_4, window_bounds = array<i64: 8, 16>}, {pipeline_mode = #tpu.pipeline_mode<synchronous>, transform_indices = @transform_5, window_bounds = array<i64: 3, 8, 16>}, {pipeline_mode = #tpu.pipeline_mode<synchronous>, transform_indices = @transform_6, window_bounds = array<i64: 3, 16, 16>}, {pipeline_mode = #tpu.pipeline_mode<synchronous>, transform_indices = @transform_7, window_bounds = array<i64: 3, 1, 16>}, {pipeline_mode = #tpu.pipeline_mode<synchronous>, transform_indices = @transform_8, window_bounds = array<i64: 3, 1, 16>}, {transform_indices = @transform_9, window_bounds = array<i64: 1, 32, 16>}]} {
    %c0_i32 = arith.constant 0 : i32
    %0 = arith.cmpi eq, %arg0, %c0_i32 : i32
    %1 = arith.extui %0 : i1 to i32
    %c0_i32_0 = arith.constant 0 : i32
    %2 = arith.cmpi ne, %1, %c0_i32_0 : i32
    scf.if %2 {
      %c0_65 = arith.constant 0 : index
      %c0_66 = arith.constant 0 : index
      %88 = vector.load %arg5[%c0_65, %c0_66] : memref<8x16xf32, #tpu.memory_space<vmem>>, vector<8x16xf32>
      %c0_67 = arith.constant 0 : index
      %c0_68 = arith.constant 0 : index
      %89 = vector.load %arg11[%c0_67, %c0_68] : memref<8x16xf32, #tpu.memory_space<vmem>>, vector<8x16xf32>
      tpu.vector_store %arg11[%c0_67, %c0_68], %88 {strides = array<i32>} : memref<8x16xf32, #tpu.memory_space<vmem>>, vector<8x16xf32>,
    } else {
    }
    %c0 = arith.constant 0 : index
    %c0_1 = arith.constant 0 : index
    %c0_2 = arith.constant 0 : index
    %3 = vector.load %arg3[%c0, %c0_1, %c0_2] : memref<1x32x8xf32, #tpu.memory_space<vmem>>, vector<1x32x8xf32>
    %4 = vector.shape_cast %3 : vector<1x32x8xf32> to vector<32x8xf32>
    %c0_3 = arith.constant 0 : index
    %c0_4 = arith.constant 0 : index
    %c0_5 = arith.constant 0 : index
    %5 = vector.load %arg4[%c0_3, %c0_4, %c0_5] : memref<1x32x32xf32, #tpu.memory_space<vmem>>, vector<1x32x32xf32>
    %6 = vector.shape_cast %5 : vector<1x32x32xf32> to vector<32x32xf32>
    %cst = arith.constant dense<0.000000e+00> : vector<32x8xf32>
    %7 = tpu.matmul %6, %4, %cst {dimension_numbers = #tpu.dot_dimension_numbers<[1], [0], [0], [1], [0, 0, 1, 1], [], []>} : vector<32x32xf32>, vector<32x8xf32>, vector<32x8xf32> -> vector<32x8xf32>
    %8 = tpu.iota {dimensions = array<i32: 1>} : vector<8x32xi32>
    %c0_6 = arith.constant 0 : index
    %c0_7 = arith.constant 0 : index
    %c0_8 = arith.constant 0 : index
    %9 = vector.load %arg1[%c0_6, %c0_7, %c0_8] : memref<1x8x1xi32, #tpu.memory_space<vmem>>, vector<1x8x1xi32>
    %10 = vector.shape_cast %9 : vector<1x8x1xi32> to vector<8x1xi32>
    %11 = vector.broadcast %10 : vector<8x1xi32> to vector<8x32xi32>
    %12 = arith.cmpi eq, %8, %11 : vector<8x32xi32>
    %c0_9 = arith.constant 0 : index
    %c0_10 = arith.constant 0 : index
    %c0_11 = arith.constant 0 : index
    %13 = vector.load %arg2[%c0_9, %c0_10, %c0_11] : memref<1x8x1xf32, #tpu.memory_space<vmem>>, vector<1x8x1xf32>
    %14 = vector.shape_cast %13 : vector<1x8x1xf32> to vector<8x1xf32>
    %cst_12 = arith.constant 0.000000e+00 : f32
    %15 = vector.shape_cast %14 : vector<8x1xf32> to vector<8x1xf32>
    %16 = vector.broadcast %15 : vector<8x1xf32> to vector<8x32xf32>
    %17 = vector.broadcast %cst_12 : f32 to vector<8x32xf32>
    %18 = arith.select %12, %16, %17 : vector<8x32xi1>, vector<8x32xf32>
    %cst_13 = arith.constant dense<0.000000e+00> : vector<8x8xf32>
    %19 = tpu.matmul %18, %4, %cst_13 {dimension_numbers = #tpu.dot_dimension_numbers<[1], [0], [0], [1], [0, 0, 1, 1], [], []>} : vector<8x32xf32>, vector<32x8xf32>, vector<8x8xf32> -> vector<8x8xf32>
    %c0_14 = arith.constant 0 : index
    %c0_15 = arith.constant 0 : index
    %20 = vector.load %arg11[%c0_14, %c0_15] : memref<8x16xf32, #tpu.memory_space<vmem>>, vector<8x16xf32>
    %c0_16 = arith.constant 0 : index
    %c0_17 = arith.constant 0 : index
    %c0_18 = arith.constant 0 : index
    %21 = vector.load %arg6[%c0_16, %c0_17, %c0_18] : memref<3x8x16xf32, #tpu.memory_space<vmem>>, vector<1x8x16xf32>
    %22 = vector.shape_cast %21 : vector<1x8x16xf32> to vector<8x16xf32>
    %cst_19 = arith.constant dense<0.000000e+00> : vector<8x16xf32>
    %23 = tpu.matmul %19, %22, %cst_19 {dimension_numbers = #tpu.dot_dimension_numbers<[1], [0], [0], [1], [0, 0, 1, 1], [], []>} : vector<8x8xf32>, vector<8x16xf32>, vector<8x16xf32> -> vector<8x16xf32>
    %c0_20 = arith.constant 0 : index
    %c0_21 = arith.constant 0 : index
    %c0_22 = arith.constant 0 : index
    %24 = vector.load %arg8[%c0_20, %c0_21, %c0_22] : memref<3x1x16xf32, #tpu.memory_space<vmem>>, vector<1x1x16xf32>
    %25 = vector.shape_cast %24 : vector<1x1x16xf32> to vector<1x16xf32>
    %26 = vector.broadcast %25 : vector<1x16xf32> to vector<8x16xf32>
    %27 = arith.addf %23, %26 : vector<8x16xf32>
    %c0_23 = arith.constant 0 : index
    %c0_24 = arith.constant 0 : index
    %c0_25 = arith.constant 0 : index
    %28 = vector.load %arg7[%c0_23, %c0_24, %c0_25] : memref<3x16x16xf32, #tpu.memory_space<vmem>>, vector<1x16x16xf32>
    %29 = vector.shape_cast %28 : vector<1x16x16xf32> to vector<16x16xf32>
    %cst_26 = arith.constant dense<0.000000e+00> : vector<8x16xf32>
    %30 = tpu.matmul %20, %29, %cst_26 {dimension_numbers = #tpu.dot_dimension_numbers<[1], [0], [0], [1], [0, 0, 1, 1], [], []>} : vector<8x16xf32>, vector<16x16xf32>, vector<8x16xf32> -> vector<8x16xf32>
    %c0_27 = arith.constant 0 : index
    %c0_28 = arith.constant 0 : index
    %c0_29 = arith.constant 0 : index
    %31 = vector.load %arg9[%c0_27, %c0_28, %c0_29] : memref<3x1x16xf32, #tpu.memory_space<vmem>>, vector<1x1x16xf32>
    %32 = vector.shape_cast %31 : vector<1x1x16xf32> to vector<1x16xf32>
    %33 = vector.broadcast %32 : vector<1x16xf32> to vector<8x16xf32>
    %34 = arith.addf %30, %33 : vector<8x16xf32>
    %c1 = arith.constant 1 : index
    %c0_30 = arith.constant 0 : index
    %c0_31 = arith.constant 0 : index
    %35 = vector.load %arg6[%c1, %c0_30, %c0_31] : memref<3x8x16xf32, #tpu.memory_space<vmem>>, vector<1x8x16xf32>
    %36 = vector.shape_cast %35 : vector<1x8x16xf32> to vector<8x16xf32>
    %cst_32 = arith.constant dense<0.000000e+00> : vector<8x16xf32>
    %37 = tpu.matmul %19, %36, %cst_32 {dimension_numbers = #tpu.dot_dimension_numbers<[1], [0], [0], [1], [0, 0, 1, 1], [], []>} : vector<8x8xf32>, vector<8x16xf32>, vector<8x16xf32> -> vector<8x16xf32>
    %c1_33 = arith.constant 1 : index
    %c0_34 = arith.constant 0 : index
    %c0_35 = arith.constant 0 : index
    %38 = vector.load %arg8[%c1_33, %c0_34, %c0_35] : memref<3x1x16xf32, #tpu.memory_space<vmem>>, vector<1x1x16xf32>
    %39 = vector.shape_cast %38 : vector<1x1x16xf32> to vector<1x16xf32>
    %40 = vector.broadcast %39 : vector<1x16xf32> to vector<8x16xf32>
    %41 = arith.addf %37, %40 : vector<8x16xf32>
    %c1_36 = arith.constant 1 : index
    %c0_37 = arith.constant 0 : index
    %c0_38 = arith.constant 0 : index
    %42 = vector.load %arg7[%c1_36, %c0_37, %c0_38] : memref<3x16x16xf32, #tpu.memory_space<vmem>>, vector<1x16x16xf32>
    %43 = vector.shape_cast %42 : vector<1x16x16xf32> to vector<16x16xf32>
    %cst_39 = arith.constant dense<0.000000e+00> : vector<8x16xf32>
    %44 = tpu.matmul %20, %43, %cst_39 {dimension_numbers = #tpu.dot_dimension_numbers<[1], [0], [0], [1], [0, 0, 1, 1], [], []>} : vector<8x16xf32>, vector<16x16xf32>, vector<8x16xf32> -> vector<8x16xf32>
    %c1_40 = arith.constant 1 : index
    %c0_41 = arith.constant 0 : index
    %c0_42 = arith.constant 0 : index
    %45 = vector.load %arg9[%c1_40, %c0_41, %c0_42] : memref<3x1x16xf32, #tpu.memory_space<vmem>>, vector<1x1x16xf32>
    %46 = vector.shape_cast %45 : vector<1x1x16xf32> to vector<1x16xf32>
    %47 = vector.broadcast %46 : vector<1x16xf32> to vector<8x16xf32>
    %48 = arith.addf %44, %47 : vector<8x16xf32>
    %c2 = arith.constant 2 : index
    %c0_43 = arith.constant 0 : index
    %c0_44 = arith.constant 0 : index
    %49 = vector.load %arg6[%c2, %c0_43, %c0_44] : memref<3x8x16xf32, #tpu.memory_space<vmem>>, vector<1x8x16xf32>
    %50 = vector.shape_cast %49 : vector<1x8x16xf32> to vector<8x16xf32>
    %cst_45 = arith.constant dense<0.000000e+00> : vector<8x16xf32>
    %51 = tpu.matmul %19, %50, %cst_45 {dimension_numbers = #tpu.dot_dimension_numbers<[1], [0], [0], [1], [0, 0, 1, 1], [], []>} : vector<8x8xf32>, vector<8x16xf32>, vector<8x16xf32> -> vector<8x16xf32>
    %c2_46 = arith.constant 2 : index
    %c0_47 = arith.constant 0 : index
    %c0_48 = arith.constant 0 : index
    %52 = vector.load %arg8[%c2_46, %c0_47, %c0_48] : memref<3x1x16xf32, #tpu.memory_space<vmem>>, vector<1x1x16xf32>
    %53 = vector.shape_cast %52 : vector<1x1x16xf32> to vector<1x16xf32>
    %54 = vector.broadcast %53 : vector<1x16xf32> to vector<8x16xf32>
    %55 = arith.addf %51, %54 : vector<8x16xf32>
    %c2_49 = arith.constant 2 : index
    %c0_50 = arith.constant 0 : index
    %c0_51 = arith.constant 0 : index
    %56 = vector.load %arg7[%c2_49, %c0_50, %c0_51] : memref<3x16x16xf32, #tpu.memory_space<vmem>>, vector<1x16x16xf32>
    %57 = vector.shape_cast %56 : vector<1x16x16xf32> to vector<16x16xf32>
    %cst_52 = arith.constant dense<0.000000e+00> : vector<8x16xf32>
    %58 = tpu.matmul %20, %57, %cst_52 {dimension_numbers = #tpu.dot_dimension_numbers<[1], [0], [0], [1], [0, 0, 1, 1], [], []>} : vector<8x16xf32>, vector<16x16xf32>, vector<8x16xf32> -> vector<8x16xf32>
    %c2_53 = arith.constant 2 : index
    %c0_54 = arith.constant 0 : index
    %c0_55 = arith.constant 0 : index
    %59 = vector.load %arg9[%c2_53, %c0_54, %c0_55] : memref<3x1x16xf32, #tpu.memory_space<vmem>>, vector<1x1x16xf32>
    %60 = vector.shape_cast %59 : vector<1x1x16xf32> to vector<1x16xf32>
    %61 = vector.broadcast %60 : vector<1x16xf32> to vector<8x16xf32>
    %62 = arith.addf %58, %61 : vector<8x16xf32>
    %63 = arith.addf %27, %34 : vector<8x16xf32>
    %64 = arith.negf %63 : vector<8x16xf32>
    %65 = math.exp %64 : vector<8x16xf32>
    %cst_56 = arith.constant 1.000000e+00 : f32
    %66 = vector.broadcast %cst_56 : f32 to vector<8x16xf32>
    %67 = arith.addf %66, %65 : vector<8x16xf32>
    %68 = arith.divf %66, %67 : vector<8x16xf32>
    %69 = arith.addf %41, %48 : vector<8x16xf32>
    %70 = arith.negf %69 : vector<8x16xf32>
    %71 = math.exp %70 : vector<8x16xf32>
    %cst_57 = arith.constant 1.000000e+00 : f32
    %72 = vector.broadcast %cst_57 : f32 to vector<8x16xf32>
    %73 = arith.addf %72, %71 : vector<8x16xf32>
    %74 = arith.divf %72, %73 : vector<8x16xf32>
    %75 = arith.mulf %68, %62 : vector<8x16xf32>
    %76 = arith.addf %55, %75 : vector<8x16xf32>
    %77 = math.tanh %76 : vector<8x16xf32>
    %cst_58 = arith.constant 1.000000e+00 : f32
    %78 = vector.broadcast %cst_58 : f32 to vector<8x16xf32>
    %79 = arith.subf %78, %74 : vector<8x16xf32>
    %80 = arith.mulf %79, %77 : vector<8x16xf32>
    %81 = arith.mulf %74, %20 : vector<8x16xf32>
    %82 = arith.addf %80, %81 : vector<8x16xf32>
    %c0_59 = arith.constant 0 : index
    %c0_60 = arith.constant 0 : index
    %83 = vector.load %arg11[%c0_59, %c0_60] : memref<8x16xf32, #tpu.memory_space<vmem>>, vector<8x16xf32>
    tpu.vector_store %arg11[%c0_59, %c0_60], %82 {strides = array<i32>} : memref<8x16xf32, #tpu.memory_space<vmem>>, vector<8x16xf32>,
    %cst_61 = arith.constant dense<0.000000e+00> : vector<32x16xf32>
    %84 = tpu.matmul %7, %82, %cst_61 {dimension_numbers = #tpu.dot_dimension_numbers<[1], [0], [0], [1], [0, 0, 1, 1], [], []>} : vector<32x8xf32>, vector<8x16xf32>, vector<32x16xf32> -> vector<32x16xf32>
    %c0_62 = arith.constant 0 : index
    %c0_63 = arith.constant 0 : index
    %c0_64 = arith.constant 0 : index
    %85 = vector.load %arg10[%c0_62, %c0_63, %c0_64] : memref<1x32x16xf32, #tpu.memory_space<vmem>>, vector<1x32x16xf32>
    %86 = vector.shape_cast %85 : vector<1x32x16xf32> to vector<32x16xf32>
    %87 = vector.shape_cast %84 : vector<32x16xf32> to vector<1x32x16xf32>
    tpu.vector_store %arg10[%c0_62, %c0_63, %c0_64], %87 {strides = array<i32>} : memref<1x32x16xf32, #tpu.memory_space<vmem>>, vector<1x32x16xf32>,
    return
  }
  func.func @transform_0(%arg0: i32) -> (i32, i32, i32) {
    %c0_i32 = arith.constant 0 : i32
    %c0_i32_0 = arith.constant 0 : i32
    %c0_i32_1 = arith.constant 0 : i32
    return %arg0, %c0_i32, %c0_i32_0 : i32, i32, i32
  }
  func.func @transform_1(%arg0: i32) -> (i32, i32, i32) {
    %c0_i32 = arith.constant 0 : i32
    %c0_i32_0 = arith.constant 0 : i32
    %c0_i32_1 = arith.constant 0 : i32
    return %arg0, %c0_i32, %c0_i32_0 : i32, i32, i32
  }
  func.func @transform_2(%arg0: i32) -> (i32, i32, i32) {
    %c0_i32 = arith.constant 0 : i32
    %c0_i32_0 = arith.constant 0 : i32
    %c0_i32_1 = arith.constant 0 : i32
    return %arg0, %c0_i32, %c0_i32_0 : i32, i32, i32
  }
  func.func @transform_3(%arg0: i32) -> (i32, i32, i32) {
    %c0_i32 = arith.constant 0 : i32
    %c0_i32_0 = arith.constant 0 : i32
    %c0_i32_1 = arith.constant 0 : i32
    %c0_i32_2 = arith.constant 0 : i32
    return %c0_i32, %c0_i32_0, %c0_i32_1 : i32, i32, i32
  }
  func.func @transform_4(%arg0: i32) -> (i32, i32) {
    %c0_i32 = arith.constant 0 : i32
    %c0_i32_0 = arith.constant 0 : i32
    %c0_i32_1 = arith.constant 0 : i32
    return %c0_i32, %c0_i32_0 : i32, i32
  }
  func.func @transform_5(%arg0: i32) -> (i32, i32, i32) {
    %c0_i32 = arith.constant 0 : i32
    %c0_i32_0 = arith.constant 0 : i32
    %c0_i32_1 = arith.constant 0 : i32
    %c0_i32_2 = arith.constant 0 : i32
    return %c0_i32, %c0_i32_0, %c0_i32_1 : i32, i32, i32
  }
  func.func @transform_6(%arg0: i32) -> (i32, i32, i32) {
    %c0_i32 = arith.constant 0 : i32
    %c0_i32_0 = arith.constant 0 : i32
    %c0_i32_1 = arith.constant 0 : i32
    %c0_i32_2 = arith.constant 0 : i32
    return %c0_i32, %c0_i32_0, %c0_i32_1 : i32, i32, i32
  }
  func.func @transform_7(%arg0: i32) -> (i32, i32, i32) {
    %c0_i32 = arith.constant 0 : i32
    %c0_i32_0 = arith.constant 0 : i32
    %c0_i32_1 = arith.constant 0 : i32
    %c0_i32_2 = arith.constant 0 : i32
    return %c0_i32, %c0_i32_0, %c0_i32_1 : i32, i32, i32
  }
  func.func @transform_8(%arg0: i32) -> (i32, i32, i32) {
    %c0_i32 = arith.constant 0 : i32
    %c0_i32_0 = arith.constant 0 : i32
    %c0_i32_1 = arith.constant 0 : i32
    %c0_i32_2 = arith.constant 0 : i32
    return %c0_i32, %c0_i32_0, %c0_i32_1 : i32, i32, i32
  }
  func.func @transform_9(%arg0: i32) -> (i32, i32, i32) {
    %c0_i32 = arith.constant 0 : i32
    %c0_i32_0 = arith.constant 0 : i32
    %c0_i32_1 = arith.constant 0 : i32
    return %arg0, %c0_i32, %c0_i32_0 : i32, i32, i32
  }
}

module attributes {stable_mosaic.version = 11 : i64} {
  func.func @_evolve_layer_kernel(%arg0: i32, %arg1: memref<1x16x1xi32, #tpu.memory_space<vmem>>, %arg2: memref<1x16x1xf32, #tpu.memory_space<vmem>>, %arg3: memref<1x32x16xf32, #tpu.memory_space<vmem>>, %arg4: memref<1x32x32xf32, #tpu.memory_space<vmem>>, %arg5: memref<16x8xf32, #tpu.memory_space<vmem>>, %arg6: memref<3x16x8xf32, #tpu.memory_space<vmem>>, %arg7: memref<3x8x8xf32, #tpu.memory_space<vmem>>, %arg8: memref<3x1x8xf32, #tpu.memory_space<vmem>>, %arg9: memref<3x1x8xf32, #tpu.memory_space<vmem>>, %arg10: memref<1x32x8xf32, #tpu.memory_space<vmem>>, %arg11: memref<16x8xf32, #tpu.memory_space<vmem>>) attributes {dimension_semantics = [#tpu.dimension_semantics<arbitrary>], iteration_bounds = array<i64: 3>, scalar_prefetch = 0 : i64, scratch_operands = 1 : i64, tpu.core_type = #tpu.core_type<tc>, window_params = [{transform_indices = @transform_0, window_bounds = array<i64: 1, 16, 1>}, {transform_indices = @transform_1, window_bounds = array<i64: 1, 16, 1>}, {transform_indices = @transform_2, window_bounds = array<i64: 1, 32, 16>}, {pipeline_mode = #tpu.pipeline_mode<synchronous>, transform_indices = @transform_3, window_bounds = array<i64: 1, 32, 32>}, {pipeline_mode = #tpu.pipeline_mode<synchronous>, transform_indices = @transform_4, window_bounds = array<i64: 16, 8>}, {pipeline_mode = #tpu.pipeline_mode<synchronous>, transform_indices = @transform_5, window_bounds = array<i64: 3, 16, 8>}, {pipeline_mode = #tpu.pipeline_mode<synchronous>, transform_indices = @transform_6, window_bounds = array<i64: 3, 8, 8>}, {pipeline_mode = #tpu.pipeline_mode<synchronous>, transform_indices = @transform_7, window_bounds = array<i64: 3, 1, 8>}, {pipeline_mode = #tpu.pipeline_mode<synchronous>, transform_indices = @transform_8, window_bounds = array<i64: 3, 1, 8>}, {pipeline_mode = #tpu.pipeline_mode<synchronous>, transform_indices = @transform_9, window_bounds = array<i64: 1, 32, 8>}]} {
    %c0_i32 = arith.constant 0 : i32
    %0 = arith.cmpi eq, %arg0, %c0_i32 : i32
    %1 = arith.extui %0 : i1 to i32
    %c0_i32_0 = arith.constant 0 : i32
    %2 = arith.cmpi ne, %1, %c0_i32_0 : i32
    scf.if %2 {
      %c0_65 = arith.constant 0 : index
      %c0_66 = arith.constant 0 : index
      %88 = vector.load %arg5[%c0_65, %c0_66] : memref<16x8xf32, #tpu.memory_space<vmem>>, vector<16x8xf32>
      %c0_67 = arith.constant 0 : index
      %c0_68 = arith.constant 0 : index
      %89 = vector.load %arg11[%c0_67, %c0_68] : memref<16x8xf32, #tpu.memory_space<vmem>>, vector<16x8xf32>
      tpu.vector_store %arg11[%c0_67, %c0_68], %88 {strides = array<i32>} : memref<16x8xf32, #tpu.memory_space<vmem>>, vector<16x8xf32>,
    } else {
    }
    %c0 = arith.constant 0 : index
    %c0_1 = arith.constant 0 : index
    %c0_2 = arith.constant 0 : index
    %3 = vector.load %arg3[%c0, %c0_1, %c0_2] : memref<1x32x16xf32, #tpu.memory_space<vmem>>, vector<1x32x16xf32>
    %4 = vector.shape_cast %3 : vector<1x32x16xf32> to vector<32x16xf32>
    %c0_3 = arith.constant 0 : index
    %c0_4 = arith.constant 0 : index
    %c0_5 = arith.constant 0 : index
    %5 = vector.load %arg4[%c0_3, %c0_4, %c0_5] : memref<1x32x32xf32, #tpu.memory_space<vmem>>, vector<1x32x32xf32>
    %6 = vector.shape_cast %5 : vector<1x32x32xf32> to vector<32x32xf32>
    %cst = arith.constant dense<0.000000e+00> : vector<32x16xf32>
    %7 = tpu.matmul %6, %4, %cst {dimension_numbers = #tpu.dot_dimension_numbers<[1], [0], [0], [1], [0, 0, 1, 1], [], []>} : vector<32x32xf32>, vector<32x16xf32>, vector<32x16xf32> -> vector<32x16xf32>
    %8 = tpu.iota {dimensions = array<i32: 1>} : vector<16x32xi32>
    %c0_6 = arith.constant 0 : index
    %c0_7 = arith.constant 0 : index
    %c0_8 = arith.constant 0 : index
    %9 = vector.load %arg1[%c0_6, %c0_7, %c0_8] : memref<1x16x1xi32, #tpu.memory_space<vmem>>, vector<1x16x1xi32>
    %10 = vector.shape_cast %9 : vector<1x16x1xi32> to vector<16x1xi32>
    %11 = vector.broadcast %10 : vector<16x1xi32> to vector<16x32xi32>
    %12 = arith.cmpi eq, %8, %11 : vector<16x32xi32>
    %c0_9 = arith.constant 0 : index
    %c0_10 = arith.constant 0 : index
    %c0_11 = arith.constant 0 : index
    %13 = vector.load %arg2[%c0_9, %c0_10, %c0_11] : memref<1x16x1xf32, #tpu.memory_space<vmem>>, vector<1x16x1xf32>
    %14 = vector.shape_cast %13 : vector<1x16x1xf32> to vector<16x1xf32>
    %cst_12 = arith.constant 0.000000e+00 : f32
    %15 = vector.shape_cast %14 : vector<16x1xf32> to vector<16x1xf32>
    %16 = vector.broadcast %15 : vector<16x1xf32> to vector<16x32xf32>
    %17 = vector.broadcast %cst_12 : f32 to vector<16x32xf32>
    %18 = arith.select %12, %16, %17 : vector<16x32xi1>, vector<16x32xf32>
    %cst_13 = arith.constant dense<0.000000e+00> : vector<16x16xf32>
    %19 = tpu.matmul %18, %4, %cst_13 {dimension_numbers = #tpu.dot_dimension_numbers<[1], [0], [0], [1], [0, 0, 1, 1], [], []>} : vector<16x32xf32>, vector<32x16xf32>, vector<16x16xf32> -> vector<16x16xf32>
    %c0_14 = arith.constant 0 : index
    %c0_15 = arith.constant 0 : index
    %20 = vector.load %arg11[%c0_14, %c0_15] : memref<16x8xf32, #tpu.memory_space<vmem>>, vector<16x8xf32>
    %c0_16 = arith.constant 0 : index
    %c0_17 = arith.constant 0 : index
    %c0_18 = arith.constant 0 : index
    %21 = vector.load %arg6[%c0_16, %c0_17, %c0_18] : memref<3x16x8xf32, #tpu.memory_space<vmem>>, vector<1x16x8xf32>
    %22 = vector.shape_cast %21 : vector<1x16x8xf32> to vector<16x8xf32>
    %cst_19 = arith.constant dense<0.000000e+00> : vector<16x8xf32>
    %23 = tpu.matmul %19, %22, %cst_19 {dimension_numbers = #tpu.dot_dimension_numbers<[1], [0], [0], [1], [0, 0, 1, 1], [], []>} : vector<16x16xf32>, vector<16x8xf32>, vector<16x8xf32> -> vector<16x8xf32>
    %c0_20 = arith.constant 0 : index
    %c0_21 = arith.constant 0 : index
    %c0_22 = arith.constant 0 : index
    %24 = vector.load %arg8[%c0_20, %c0_21, %c0_22] : memref<3x1x8xf32, #tpu.memory_space<vmem>>, vector<1x1x8xf32>
    %25 = vector.shape_cast %24 : vector<1x1x8xf32> to vector<1x8xf32>
    %26 = vector.broadcast %25 : vector<1x8xf32> to vector<16x8xf32>
    %27 = arith.addf %23, %26 : vector<16x8xf32>
    %c0_23 = arith.constant 0 : index
    %c0_24 = arith.constant 0 : index
    %c0_25 = arith.constant 0 : index
    %28 = vector.load %arg7[%c0_23, %c0_24, %c0_25] : memref<3x8x8xf32, #tpu.memory_space<vmem>>, vector<1x8x8xf32>
    %29 = vector.shape_cast %28 : vector<1x8x8xf32> to vector<8x8xf32>
    %cst_26 = arith.constant dense<0.000000e+00> : vector<16x8xf32>
    %30 = tpu.matmul %20, %29, %cst_26 {dimension_numbers = #tpu.dot_dimension_numbers<[1], [0], [0], [1], [0, 0, 1, 1], [], []>} : vector<16x8xf32>, vector<8x8xf32>, vector<16x8xf32> -> vector<16x8xf32>
    %c0_27 = arith.constant 0 : index
    %c0_28 = arith.constant 0 : index
    %c0_29 = arith.constant 0 : index
    %31 = vector.load %arg9[%c0_27, %c0_28, %c0_29] : memref<3x1x8xf32, #tpu.memory_space<vmem>>, vector<1x1x8xf32>
    %32 = vector.shape_cast %31 : vector<1x1x8xf32> to vector<1x8xf32>
    %33 = vector.broadcast %32 : vector<1x8xf32> to vector<16x8xf32>
    %34 = arith.addf %30, %33 : vector<16x8xf32>
    %c1 = arith.constant 1 : index
    %c0_30 = arith.constant 0 : index
    %c0_31 = arith.constant 0 : index
    %35 = vector.load %arg6[%c1, %c0_30, %c0_31] : memref<3x16x8xf32, #tpu.memory_space<vmem>>, vector<1x16x8xf32>
    %36 = vector.shape_cast %35 : vector<1x16x8xf32> to vector<16x8xf32>
    %cst_32 = arith.constant dense<0.000000e+00> : vector<16x8xf32>
    %37 = tpu.matmul %19, %36, %cst_32 {dimension_numbers = #tpu.dot_dimension_numbers<[1], [0], [0], [1], [0, 0, 1, 1], [], []>} : vector<16x16xf32>, vector<16x8xf32>, vector<16x8xf32> -> vector<16x8xf32>
    %c1_33 = arith.constant 1 : index
    %c0_34 = arith.constant 0 : index
    %c0_35 = arith.constant 0 : index
    %38 = vector.load %arg8[%c1_33, %c0_34, %c0_35] : memref<3x1x8xf32, #tpu.memory_space<vmem>>, vector<1x1x8xf32>
    %39 = vector.shape_cast %38 : vector<1x1x8xf32> to vector<1x8xf32>
    %40 = vector.broadcast %39 : vector<1x8xf32> to vector<16x8xf32>
    %41 = arith.addf %37, %40 : vector<16x8xf32>
    %c1_36 = arith.constant 1 : index
    %c0_37 = arith.constant 0 : index
    %c0_38 = arith.constant 0 : index
    %42 = vector.load %arg7[%c1_36, %c0_37, %c0_38] : memref<3x8x8xf32, #tpu.memory_space<vmem>>, vector<1x8x8xf32>
    %43 = vector.shape_cast %42 : vector<1x8x8xf32> to vector<8x8xf32>
    %cst_39 = arith.constant dense<0.000000e+00> : vector<16x8xf32>
    %44 = tpu.matmul %20, %43, %cst_39 {dimension_numbers = #tpu.dot_dimension_numbers<[1], [0], [0], [1], [0, 0, 1, 1], [], []>} : vector<16x8xf32>, vector<8x8xf32>, vector<16x8xf32> -> vector<16x8xf32>
    %c1_40 = arith.constant 1 : index
    %c0_41 = arith.constant 0 : index
    %c0_42 = arith.constant 0 : index
    %45 = vector.load %arg9[%c1_40, %c0_41, %c0_42] : memref<3x1x8xf32, #tpu.memory_space<vmem>>, vector<1x1x8xf32>
    %46 = vector.shape_cast %45 : vector<1x1x8xf32> to vector<1x8xf32>
    %47 = vector.broadcast %46 : vector<1x8xf32> to vector<16x8xf32>
    %48 = arith.addf %44, %47 : vector<16x8xf32>
    %c2 = arith.constant 2 : index
    %c0_43 = arith.constant 0 : index
    %c0_44 = arith.constant 0 : index
    %49 = vector.load %arg6[%c2, %c0_43, %c0_44] : memref<3x16x8xf32, #tpu.memory_space<vmem>>, vector<1x16x8xf32>
    %50 = vector.shape_cast %49 : vector<1x16x8xf32> to vector<16x8xf32>
    %cst_45 = arith.constant dense<0.000000e+00> : vector<16x8xf32>
    %51 = tpu.matmul %19, %50, %cst_45 {dimension_numbers = #tpu.dot_dimension_numbers<[1], [0], [0], [1], [0, 0, 1, 1], [], []>} : vector<16x16xf32>, vector<16x8xf32>, vector<16x8xf32> -> vector<16x8xf32>
    %c2_46 = arith.constant 2 : index
    %c0_47 = arith.constant 0 : index
    %c0_48 = arith.constant 0 : index
    %52 = vector.load %arg8[%c2_46, %c0_47, %c0_48] : memref<3x1x8xf32, #tpu.memory_space<vmem>>, vector<1x1x8xf32>
    %53 = vector.shape_cast %52 : vector<1x1x8xf32> to vector<1x8xf32>
    %54 = vector.broadcast %53 : vector<1x8xf32> to vector<16x8xf32>
    %55 = arith.addf %51, %54 : vector<16x8xf32>
    %c2_49 = arith.constant 2 : index
    %c0_50 = arith.constant 0 : index
    %c0_51 = arith.constant 0 : index
    %56 = vector.load %arg7[%c2_49, %c0_50, %c0_51] : memref<3x8x8xf32, #tpu.memory_space<vmem>>, vector<1x8x8xf32>
    %57 = vector.shape_cast %56 : vector<1x8x8xf32> to vector<8x8xf32>
    %cst_52 = arith.constant dense<0.000000e+00> : vector<16x8xf32>
    %58 = tpu.matmul %20, %57, %cst_52 {dimension_numbers = #tpu.dot_dimension_numbers<[1], [0], [0], [1], [0, 0, 1, 1], [], []>} : vector<16x8xf32>, vector<8x8xf32>, vector<16x8xf32> -> vector<16x8xf32>
    %c2_53 = arith.constant 2 : index
    %c0_54 = arith.constant 0 : index
    %c0_55 = arith.constant 0 : index
    %59 = vector.load %arg9[%c2_53, %c0_54, %c0_55] : memref<3x1x8xf32, #tpu.memory_space<vmem>>, vector<1x1x8xf32>
    %60 = vector.shape_cast %59 : vector<1x1x8xf32> to vector<1x8xf32>
    %61 = vector.broadcast %60 : vector<1x8xf32> to vector<16x8xf32>
    %62 = arith.addf %58, %61 : vector<16x8xf32>
    %63 = arith.addf %27, %34 : vector<16x8xf32>
    %64 = arith.negf %63 : vector<16x8xf32>
    %65 = math.exp %64 : vector<16x8xf32>
    %cst_56 = arith.constant 1.000000e+00 : f32
    %66 = vector.broadcast %cst_56 : f32 to vector<16x8xf32>
    %67 = arith.addf %66, %65 : vector<16x8xf32>
    %68 = arith.divf %66, %67 : vector<16x8xf32>
    %69 = arith.addf %41, %48 : vector<16x8xf32>
    %70 = arith.negf %69 : vector<16x8xf32>
    %71 = math.exp %70 : vector<16x8xf32>
    %cst_57 = arith.constant 1.000000e+00 : f32
    %72 = vector.broadcast %cst_57 : f32 to vector<16x8xf32>
    %73 = arith.addf %72, %71 : vector<16x8xf32>
    %74 = arith.divf %72, %73 : vector<16x8xf32>
    %75 = arith.mulf %68, %62 : vector<16x8xf32>
    %76 = arith.addf %55, %75 : vector<16x8xf32>
    %77 = math.tanh %76 : vector<16x8xf32>
    %cst_58 = arith.constant 1.000000e+00 : f32
    %78 = vector.broadcast %cst_58 : f32 to vector<16x8xf32>
    %79 = arith.subf %78, %74 : vector<16x8xf32>
    %80 = arith.mulf %79, %77 : vector<16x8xf32>
    %81 = arith.mulf %74, %20 : vector<16x8xf32>
    %82 = arith.addf %80, %81 : vector<16x8xf32>
    %c0_59 = arith.constant 0 : index
    %c0_60 = arith.constant 0 : index
    %83 = vector.load %arg11[%c0_59, %c0_60] : memref<16x8xf32, #tpu.memory_space<vmem>>, vector<16x8xf32>
    tpu.vector_store %arg11[%c0_59, %c0_60], %82 {strides = array<i32>} : memref<16x8xf32, #tpu.memory_space<vmem>>, vector<16x8xf32>,
    %cst_61 = arith.constant dense<0.000000e+00> : vector<32x8xf32>
    %84 = tpu.matmul %7, %82, %cst_61 {dimension_numbers = #tpu.dot_dimension_numbers<[1], [0], [0], [1], [0, 0, 1, 1], [], []>} : vector<32x16xf32>, vector<16x8xf32>, vector<32x8xf32> -> vector<32x8xf32>
    %c0_62 = arith.constant 0 : index
    %c0_63 = arith.constant 0 : index
    %c0_64 = arith.constant 0 : index
    %85 = vector.load %arg10[%c0_62, %c0_63, %c0_64] : memref<1x32x8xf32, #tpu.memory_space<vmem>>, vector<1x32x8xf32>
    %86 = vector.shape_cast %85 : vector<1x32x8xf32> to vector<32x8xf32>
    %87 = vector.shape_cast %84 : vector<32x8xf32> to vector<1x32x8xf32>
    tpu.vector_store %arg10[%c0_62, %c0_63, %c0_64], %87 {strides = array<i32>} : memref<1x32x8xf32, #tpu.memory_space<vmem>>, vector<1x32x8xf32>,
    return
  }
  func.func @transform_0(%arg0: i32) -> (i32, i32, i32) {
    %c0_i32 = arith.constant 0 : i32
    %c0_i32_0 = arith.constant 0 : i32
    %c0_i32_1 = arith.constant 0 : i32
    return %arg0, %c0_i32, %c0_i32_0 : i32, i32, i32
  }
  func.func @transform_1(%arg0: i32) -> (i32, i32, i32) {
    %c0_i32 = arith.constant 0 : i32
    %c0_i32_0 = arith.constant 0 : i32
    %c0_i32_1 = arith.constant 0 : i32
    return %arg0, %c0_i32, %c0_i32_0 : i32, i32, i32
  }
  func.func @transform_2(%arg0: i32) -> (i32, i32, i32) {
    %c0_i32 = arith.constant 0 : i32
    %c0_i32_0 = arith.constant 0 : i32
    %c0_i32_1 = arith.constant 0 : i32
    return %arg0, %c0_i32, %c0_i32_0 : i32, i32, i32
  }
  func.func @transform_3(%arg0: i32) -> (i32, i32, i32) {
    %c0_i32 = arith.constant 0 : i32
    %c0_i32_0 = arith.constant 0 : i32
    %c0_i32_1 = arith.constant 0 : i32
    %c0_i32_2 = arith.constant 0 : i32
    return %c0_i32, %c0_i32_0, %c0_i32_1 : i32, i32, i32
  }
  func.func @transform_4(%arg0: i32) -> (i32, i32) {
    %c0_i32 = arith.constant 0 : i32
    %c0_i32_0 = arith.constant 0 : i32
    %c0_i32_1 = arith.constant 0 : i32
    return %c0_i32, %c0_i32_0 : i32, i32
  }
  func.func @transform_5(%arg0: i32) -> (i32, i32, i32) {
    %c0_i32 = arith.constant 0 : i32
    %c0_i32_0 = arith.constant 0 : i32
    %c0_i32_1 = arith.constant 0 : i32
    %c0_i32_2 = arith.constant 0 : i32
    return %c0_i32, %c0_i32_0, %c0_i32_1 : i32, i32, i32
  }
  func.func @transform_6(%arg0: i32) -> (i32, i32, i32) {
    %c0_i32 = arith.constant 0 : i32
    %c0_i32_0 = arith.constant 0 : i32
    %c0_i32_1 = arith.constant 0 : i32
    %c0_i32_2 = arith.constant 0 : i32
    return %c0_i32, %c0_i32_0, %c0_i32_1 : i32, i32, i32
  }
  func.func @transform_7(%arg0: i32) -> (i32, i32, i32) {
    %c0_i32 = arith.constant 0 : i32
    %c0_i32_0 = arith.constant 0 : i32
    %c0_i32_1 = arith.constant 0 : i32
    %c0_i32_2 = arith.constant 0 : i32
    return %c0_i32, %c0_i32_0, %c0_i32_1 : i32, i32, i32
  }
  func.func @transform_8(%arg0: i32) -> (i32, i32, i32) {
    %c0_i32 = arith.constant 0 : i32
    %c0_i32_0 = arith.constant 0 : i32
    %c0_i32_1 = arith.constant 0 : i32
    %c0_i32_2 = arith.constant 0 : i32
    return %c0_i32, %c0_i32_0, %c0_i32_1 : i32, i32, i32
  }
  func.func @transform_9(%arg0: i32) -> (i32, i32, i32) {
    %c0_i32 = arith.constant 0 : i32
    %c0_i32_0 = arith.constant 0 : i32
    %c0_i32_1 = arith.constant 0 : i32
    %c0_i32_2 = arith.constant 0 : i32
    return %c0_i32, %c0_i32_0, %c0_i32_1 : i32, i32, i32
  }
}

</mosaic_0001>

<llo_original>
// kernel: double_layer_forward.2
$region0: #{double_layer_forward.2}
  #allocation0 [shape = 'u32[]', space=smem, size = 0x4, offset = 0x4, fixed_abs, tag = 'smem constant byte address 0x4 - core index']
  #allocation1 [shape = 'u32[144,128]{1,0:T(1,128)}', space=vmem, size = 0x12000, scoped, tag = 'internal scratch']
  #allocation2 [shape = 'f32[8,16]{1,0:T(8,128)}', space=vmem, size = 0x1000, scoped, tag = 'scratch operand']
  %s0 = inlined_call_operand.vmem [shape: s32[3,8,1], index: 0, kind: input, shape index: {}]
  %s1 = inlined_call_operand.vmem [shape: f32[3,8,1], index: 1, kind: input, shape index: {}]
  %s2 = inlined_call_operand.vmem [shape: f32[3,32,8], index: 2, kind: input, shape index: {}]
  %s3 = inlined_call_operand.vmem [shape: f32[1,32,32], index: 3, kind: input, shape index: {}]
  %s4 = inlined_call_operand.vmem [shape: f32[8,16], index: 4, kind: input, shape index: {}]
  %s5 = inlined_call_operand.vmem [shape: f32[3,8,16], index: 5, kind: input, shape index: {}]
  %s6 = inlined_call_operand.vmem [shape: f32[3,16,16], index: 6, kind: input, shape index: {}]
  %s7 = inlined_call_operand.vmem [shape: f32[3,1,16], index: 7, kind: input, shape index: {}]
  %s8 = inlined_call_operand.vmem [shape: f32[3,1,16], index: 8, kind: input, shape index: {}]
  %s9 = inlined_call_operand.vmem [shape: f32[3,32,16], index: 9, kind: output, shape index: {}]
  %s10 = sld [smem:[#allocation0]]
  $region73: #{double_layer_forward.2} parent=0
    _
  %s12 = ssub.s32 1, %s10
  %s13 = scalar_select 0, %s12, %s10
  loop: start=0, step=1, limit=5
  $region2: #{double_layer_forward.2} parent=0 // loop_pre_header
    _
  $region3: #{double_layer_forward.2} parent=0 // loop_header
    %s15 = sphi 0, %s19
    %p16 = scmp.ge.s32.totalorder %s15, 5
    %s25 = sphi 0, %s27
    %s28 = sphi 0, %s25
    %s29 = sphi 0, %s28
    %s45 = sphi 0, %s29
    %s51 = sphi 0, %s53
    %s54 = sphi 0, %s51
    %s55 = sphi 0, %s54
    %s71 = sphi 0, %s55
    %s77 = sphi 0, %s79
    %s80 = sphi 0, %s77
    %s81 = sphi 0, %s80
    %s97 = sphi 0, %s81
    %s101 = sphi 0, %s101
    %s103 = sphi 0, %s101
    %s104 = sphi 0, %s103
    %s118 = sphi 0, %s104
    %s122 = sphi 0, %s122
    %s124 = sphi 0, %s122
    %s125 = sphi 0, %s124
    %s139 = sphi 0, %s125
    %s143 = sphi 0, %s143
    %s145 = sphi 0, %s143
    %s146 = sphi 0, %s145
    %s160 = sphi 0, %s146
    %s164 = sphi 0, %s164
    %s166 = sphi 0, %s164
    %s167 = sphi 0, %s166
    %s181 = sphi 0, %s167
    %s185 = sphi 0, %s185
    %s187 = sphi 0, %s185
    %s188 = sphi 0, %s187
    %s202 = sphi 0, %s188
    %s206 = sphi 0, %s206
    %s208 = sphi 0, %s206
    %s209 = sphi 0, %s208
    %s223 = sphi 0, %s209
    %s229 = sphi 0, %s231
    %s232 = sphi 0, %s229
    %s233 = sphi 0, %s232
    %s249 = sphi 0, %s233
  $region4: #{double_layer_forward.2} parent=0 // loop_header_branch
    %18 = sbr.rel (%p16) target = $region8
  $region5: #{double_layer_forward.2} parent=0 // loop_body
    %s20 = ssub.s32 %s15, 1
    %s21 = ssub.s32 %s15, 2
    %s22 = sadd.s32 %s15, 1
    %s23 = ssub.s32 %s15, %s22
    %p24 = scmp.eq.s32.totalorder %s23, 0
    %s26 = sadd.s32 %s25, 1
    %s27 = scalar_select %p24, %s25, %s26
    %p30 = pneg %p24
    %p31 = scmp.eq.s32.totalorder %s15, 2
    %p32 = por %p30, %p31
    %p33 = scmp.ne.s32.totalorder %s25, %s28
    %p34 = scmp.eq.s32.totalorder %s15, 0
    %p35 = por %p33, %p34
    %p36 = scmp.ne.s32.totalorder %s25, %s28
    %p37 = scmp.eq.s32.totalorder %s20, 2
    %p38 = por %p36, %p37
    %p39 = scmp.ne.s32.totalorder %s28, %s29
    %p40 = scmp.eq.s32.totalorder %s20, 0
    %p41 = por %p39, %p40
    %p42 = scmp.ne.s32.totalorder %s28, %s29
    %p43 = scmp.eq.s32.totalorder %s21, 2
    %p44 = por %p42, %p43
    %p46 = scmp.ne.s32.totalorder %s29, %s45
    %p47 = scmp.eq.s32.totalorder %s21, 0
    %p48 = por %p46, %p47
    %s49 = ssub.s32 %s15, %s22
    %p50 = scmp.eq.s32.totalorder %s49, 0
    %s52 = sadd.s32 %s51, 1
    %s53 = scalar_select %p50, %s51, %s52
    %p56 = pneg %p50
    %p57 = scmp.eq.s32.totalorder %s15, 2
    %p58 = por %p56, %p57
    %p59 = scmp.ne.s32.totalorder %s51, %s54
    %p60 = scmp.eq.s32.totalorder %s15, 0
    %p61 = por %p59, %p60
    %p62 = scmp.ne.s32.totalorder %s51, %s54
    %p63 = scmp.eq.s32.totalorder %s20, 2
    %p64 = por %p62, %p63
    %p65 = scmp.ne.s32.totalorder %s54, %s55
    %p66 = scmp.eq.s32.totalorder %s20, 0
    %p67 = por %p65, %p66
    %p68 = scmp.ne.s32.totalorder %s54, %s55
    %p69 = scmp.eq.s32.totalorder %s21, 2
    %p70 = por %p68, %p69
    %p72 = scmp.ne.s32.totalorder %s55, %s71
    %p73 = scmp.eq.s32.totalorder %s21, 0
    %p74 = por %p72, %p73
    %s75 = ssub.s32 %s15, %s22
    %p76 = scmp.eq.s32.totalorder %s75, 0
    %s78 = sadd.s32 %s77, 1
    %s79 = scalar_select %p76, %s77, %s78
    %p82 = pneg %p76
    %p83 = scmp.eq.s32.totalorder %s15, 2
    %p84 = por %p82, %p83
    %p85 = scmp.ne.s32.totalorder %s77, %s80
    %p86 = scmp.eq.s32.totalorder %s15, 0
    %p87 = por %p85, %p86
    %p88 = scmp.ne.s32.totalorder %s77, %s80
    %p89 = scmp.eq.s32.totalorder %s20, 2
    %p90 = por %p88, %p89
    %p91 = scmp.ne.s32.totalorder %s80, %s81
    %p92 = scmp.eq.s32.totalorder %s20, 0
    %p93 = por %p91, %p92
    %p94 = scmp.ne.s32.totalorder %s80, %s81
    %p95 = scmp.eq.s32.totalorder %s21, 2
    %p96 = por %p94, %p95
    %p98 = scmp.ne.s32.totalorder %s81, %s97
    %p99 = scmp.eq.s32.totalorder %s21, 0
    %p100 = por %p98, %p99
    %s102 = sadd.s32 %s101, 1
    %p105 = scmp.eq.s32.totalorder %s15, 2
    %p106 = scmp.ne.s32.totalorder %s101, %s103
    %p107 = scmp.eq.s32.totalorder %s15, 0
    %p108 = por %p106, %p107
    %p109 = scmp.ne.s32.totalorder %s101, %s103
    %p110 = scmp.eq.s32.totalorder %s20, 2
    %p111 = por %p109, %p110
    %p112 = scmp.ne.s32.totalorder %s103, %s104
    %p113 = scmp.eq.s32.totalorder %s20, 0
    %p114 = por %p112, %p113
    %p115 = scmp.ne.s32.totalorder %s103, %s104
    %p116 = scmp.eq.s32.totalorder %s21, 2
    %p117 = por %p115, %p116
    %p119 = scmp.ne.s32.totalorder %s104, %s118
    %p120 = scmp.eq.s32.totalorder %s21, 0
    %p121 = por %p119, %p120
    %s123 = sadd.s32 %s122, 1
    %p126 = scmp.eq.s32.totalorder %s15, 2
    %p127 = scmp.ne.s32.totalorder %s122, %s124
    %p128 = scmp.eq.s32.totalorder %s15, 0
    %p129 = por %p127, %p128
    %p130 = scmp.ne.s32.totalorder %s122, %s124
    %p131 = scmp.eq.s32.totalorder %s20, 2
    %p132 = por %p130, %p131
    %p133 = scmp.ne.s32.totalorder %s124, %s125
    %p134 = scmp.eq.s32.totalorder %s20, 0
    %p135 = por %p133, %p134
    %p136 = scmp.ne.s32.totalorder %s124, %s125
    %p137 = scmp.eq.s32.totalorder %s21, 2
    %p138 = por %p136, %p137
    %p140 = scmp.ne.s32.totalorder %s125, %s139
    %p141 = scmp.eq.s32.totalorder %s21, 0
    %p142 = por %p140, %p141
    %s144 = sadd.s32 %s143, 1
    %p147 = scmp.eq.s32.totalorder %s15, 2
    %p148 = scmp.ne.s32.totalorder %s143, %s145
    %p149 = scmp.eq.s32.totalorder %s15, 0
    %p150 = por %p148, %p149
    %p151 = scmp.ne.s32.totalorder %s143, %s145
    %p152 = scmp.eq.s32.totalorder %s20, 2
    %p153 = por %p151, %p152
    %p154 = scmp.ne.s32.totalorder %s145, %s146
    %p155 = scmp.eq.s32.totalorder %s20, 0
    %p156 = por %p154, %p155
    %p157 = scmp.ne.s32.totalorder %s145, %s146
    %p158 = scmp.eq.s32.totalorder %s21, 2
    %p159 = por %p157, %p158
    %p161 = scmp.ne.s32.totalorder %s146, %s160
    %p162 = scmp.eq.s32.totalorder %s21, 0
    %p163 = por %p161, %p162
    %s165 = sadd.s32 %s164, 1
    %p168 = scmp.eq.s32.totalorder %s15, 2
    %p169 = scmp.ne.s32.totalorder %s164, %s166
    %p170 = scmp.eq.s32.totalorder %s15, 0
    %p171 = por %p169, %p170
    %p172 = scmp.ne.s32.totalorder %s164, %s166
    %p173 = scmp.eq.s32.totalorder %s20, 2
    %p174 = por %p172, %p173
    %p175 = scmp.ne.s32.totalorder %s166, %s167
    %p176 = scmp.eq.s32.totalorder %s20, 0
    %p177 = por %p175, %p176
    %p178 = scmp.ne.s32.totalorder %s166, %s167
    %p179 = scmp.eq.s32.totalorder %s21, 2
    %p180 = por %p178, %p179
    %p182 = scmp.ne.s32.totalorder %s167, %s181
    %p183 = scmp.eq.s32.totalorder %s21, 0
    %p184 = por %p182, %p183
    %s186 = sadd.s32 %s185, 1
    %p189 = scmp.eq.s32.totalorder %s15, 2
    %p190 = scmp.ne.s32.totalorder %s185, %s187
    %p191 = scmp.eq.s32.totalorder %s15, 0
    %p192 = por %p190, %p191
    %p193 = scmp.ne.s32.totalorder %s185, %s187
    %p194 = scmp.eq.s32.totalorder %s20, 2
    %p195 = por %p193, %p194
    %p196 = scmp.ne.s32.totalorder %s187, %s188
    %p197 = scmp.eq.s32.totalorder %s20, 0
    %p198 = por %p196, %p197
    %p199 = scmp.ne.s32.totalorder %s187, %s188
    %p200 = scmp.eq.s32.totalorder %s21, 2
    %p201 = por %p199, %p200
    %p203 = scmp.ne.s32.totalorder %s188, %s202
    %p204 = scmp.eq.s32.totalorder %s21, 0
    %p205 = por %p203, %p204
    %s207 = sadd.s32 %s206, 1
    %p210 = scmp.eq.s32.totalorder %s15, 2
    %p211 = scmp.ne.s32.totalorder %s206, %s208
    %p212 = scmp.eq.s32.totalorder %s15, 0
    %p213 = por %p211, %p212
    %p214 = scmp.ne.s32.totalorder %s206, %s208
    %p215 = scmp.eq.s32.totalorder %s20, 2
    %p216 = por %p214, %p215
    %p217 = scmp.ne.s32.totalorder %s208, %s209
    %p218 = scmp.eq.s32.totalorder %s20, 0
    %p219 = por %p217, %p218
    %p220 = scmp.ne.s32.totalorder %s208, %s209
    %p221 = scmp.eq.s32.totalorder %s21, 2
    %p222 = por %p220, %p221
    %p224 = scmp.ne.s32.totalorder %s209, %s223
    %p225 = scmp.eq.s32.totalorder %s21, 0
    %p226 = por %p224, %p225
    %s227 = ssub.s32 %s15, %s22
    %p228 = scmp.eq.s32.totalorder %s227, 0
    %s230 = sadd.s32 %s229, 1
    %s231 = scalar_select %p228, %s229, %s230
    %p234 = pneg %p228
    %p235 = scmp.eq.s32.totalorder %s15, 2
    %p236 = por %p234, %p235
    %p237 = scmp.ne.s32.totalorder %s229, %s232
    %p238 = scmp.eq.s32.totalorder %s15, 0
    %p239 = por %p237, %p238
    %p240 = scmp.ne.s32.totalorder %s229, %s232
    %p241 = scmp.eq.s32.totalorder %s20, 2
    %p242 = por %p240, %p241
    %p243 = scmp.ne.s32.totalorder %s232, %s233
    %p244 = scmp.eq.s32.totalorder %s20, 0
    %p245 = por %p243, %p244
    %p246 = scmp.ne.s32.totalorder %s232, %s233
    %p247 = scmp.eq.s32.totalorder %s21, 2
    %p248 = por %p246, %p247
    %p250 = scmp.ne.s32.totalorder %s233, %s249
    %p251 = scmp.eq.s32.totalorder %s21, 0
    %p252 = por %p250, %p251
    %p253 = scmp.le.s32.totalorder 1, %s15
    %p254 = scmp.lt.s32.totalorder %s15, 4
    %p255 = pnand %p253, %p254
    %p256 = pneg %p255
    // Predicated region
    $region9: #{double_layer_forward.2} parent=5 // pred_check
      _
    $region10: #{double_layer_forward.2} parent=5 // pred_check_branch
      %258 = sbr.rel (%p255) target = $region12
    $region11: #{double_layer_forward.2} parent=5 // pred_region
      %s259 = ssub.s32 %s15, 1
      // Predicated region
      $region13: #{double_layer_forward.2} parent=11 // pred_check
        %p260 = pneg %p114
      $region14: #{double_layer_forward.2} parent=11 // pred_check_branch
        %262 = sbr.rel (%p260) target = $region16
      $region15: #{double_layer_forward.2} parent=11 // pred_region
        _
      $region16: #{double_layer_forward.2} parent=11 // pred_fallthru
        _
      // Predicated region
      $region17: #{double_layer_forward.2} parent=11 // pred_check
        %p263 = pneg %p135
      $region18: #{double_layer_forward.2} parent=11 // pred_check_branch
        %265 = sbr.rel (%p263) target = $region20
      $region19: #{double_layer_forward.2} parent=11 // pred_region
        _
      $region20: #{double_layer_forward.2} parent=11 // pred_fallthru
        _
      // Predicated region
      $region21: #{double_layer_forward.2} parent=11 // pred_check
        %p266 = pneg %p156
      $region22: #{double_layer_forward.2} parent=11 // pred_check_branch
        %268 = sbr.rel (%p266) target = $region24
      $region23: #{double_layer_forward.2} parent=11 // pred_region
        _
      $region24: #{double_layer_forward.2} parent=11 // pred_fallthru
        _
      // Predicated region
      $region25: #{double_layer_forward.2} parent=11 // pred_check
        %p269 = pneg %p177
      $region26: #{double_layer_forward.2} parent=11 // pred_check_branch
        %271 = sbr.rel (%p269) target = $region28
      $region27: #{double_layer_forward.2} parent=11 // pred_region
        _
      $region28: #{double_layer_forward.2} parent=11 // pred_fallthru
        _
      // Predicated region
      $region29: #{double_layer_forward.2} parent=11 // pred_check
        %p272 = pneg %p198
      $region30: #{double_layer_forward.2} parent=11 // pred_check_branch
        %274 = sbr.rel (%p272) target = $region32
      $region31: #{double_layer_forward.2} parent=11 // pred_region
        _
      $region32: #{double_layer_forward.2} parent=11 // pred_fallthru
        _
      // Predicated region
      $region33: #{double_layer_forward.2} parent=11 // pred_check
        %p275 = pneg %p219
      $region34: #{double_layer_forward.2} parent=11 // pred_check_branch
        %277 = sbr.rel (%p275) target = $region36
      $region35: #{double_layer_forward.2} parent=11 // pred_region
        _
      $region36: #{double_layer_forward.2} parent=11 // pred_fallthru
        _
    $region12: #{double_layer_forward.2} parent=5 // pred_fallthru
      _
    %p278 = scmp.lt.s32.totalorder %s15, 3
    // Predicated region
    $region37: #{double_layer_forward.2} parent=5 // pred_check
      %p279 = pneg %p278
    $region38: #{double_layer_forward.2} parent=5 // pred_check_branch
      %281 = sbr.rel (%p279) target = $region40
    $region39: #{double_layer_forward.2} parent=5 // pred_region
      // Predicated region
      $region41: #{double_layer_forward.2} parent=39 // pred_check
        %p282 = pneg %p35
      $region42: #{double_layer_forward.2} parent=39 // pred_check_branch
        %284 = sbr.rel (%p282) target = $region44
      $region43: #{double_layer_forward.2} parent=39 // pred_region
        %p285 = scmp.lt.s32.totalorder %s15, 2
        %s286 = scalar_select %p285, %s15, 2
        %s287 = smul.addr %s286, 8
        %s288 = scalar_lea.vmem %s0, %s287
      $region44: #{double_layer_forward.2} parent=39 // pred_fallthru
        _
      // Predicated region
      $region45: #{double_layer_forward.2} parent=39 // pred_check
        %p289 = pneg %p61
      $region46: #{double_layer_forward.2} parent=39 // pred_check_branch
        %291 = sbr.rel (%p289) target = $region48
      $region47: #{double_layer_forward.2} parent=39 // pred_region
        %p292 = scmp.lt.s32.totalorder %s15, 2
        %s293 = scalar_select %p292, %s15, 2
        %s294 = smul.addr %s293, 8
        %s295 = scalar_lea.vmem %s1, %s294
      $region48: #{double_layer_forward.2} parent=39 // pred_fallthru
        _
      // Predicated region
      $region49: #{double_layer_forward.2} parent=39 // pred_check
        %p296 = pneg %p87
      $region50: #{double_layer_forward.2} parent=39 // pred_check_branch
        %298 = sbr.rel (%p296) target = $region52
      $region51: #{double_layer_forward.2} parent=39 // pred_region
        %p299 = scmp.lt.s32.totalorder %s15, 2
        %s300 = scalar_select %p299, %s15, 2
        %s301 = smul.addr %s300, 4
        %s302 = smul.addr %s301, 8
        %s303 = scalar_lea.vmem %s2, %s302
      $region52: #{double_layer_forward.2} parent=39 // pred_fallthru
        _
    $region40: #{double_layer_forward.2} parent=5 // pred_fallthru
      _
    %p304 = scmp.le.s32.totalorder 1, %s15
    %p305 = scmp.lt.s32.totalorder %s15, 4
    %p306 = pnand %p304, %p305
    %p307 = pneg %p306
    // Predicated region
    $region53: #{double_layer_forward.2} parent=5 // pred_check
      _
    $region54: #{double_layer_forward.2} parent=5 // pred_check_branch
      %309 = sbr.rel (%p306) target = $region56
    $region55: #{double_layer_forward.2} parent=5 // pred_region
      %s310 = ssub.s32 %s15, 1
      %p311 = scmp.lt.s32.totalorder %s20, 2
      %s312 = scalar_select %p311, %s20, 2
      %s313 = smul.addr %s312, 8
      %s314 = scalar_lea.vmem %s0, %s313
      %p315 = pneg %p41
      %p316 = pneg %p38
      %p317 = scmp.lt.s32.totalorder %s20, 2
      %s318 = scalar_select %p317, %s20, 2
      %s319 = smul.addr %s318, 8
      %s320 = scalar_lea.vmem %s1, %s319
      %p321 = pneg %p67
      %p322 = pneg %p64
      %p323 = scmp.lt.s32.totalorder %s20, 2
      %s324 = scalar_select %p323, %s20, 2
      %s325 = smul.addr %s324, 4
      %s326 = smul.addr %s325, 8
      %s327 = scalar_lea.vmem %s2, %s326
      %p328 = pneg %p93
      %p329 = pneg %p90
      %p330 = pneg %p114
      %p331 = pneg %p111
      %p332 = pneg %p135
      %p333 = pneg %p132
      %p334 = pneg %p156
      %p335 = pneg %p153
      %p336 = pneg %p177
      %p337 = pneg %p174
      %p338 = pneg %p198
      %p339 = pneg %p195
      %p340 = pneg %p219
      %p341 = pneg %p216
      %p342 = pneg %p245
      %p343 = pneg %p242
      %p344 = scmp.lt.s32.totalorder %s20, 2
      %s345 = scalar_select %p344, %s20, 2
      %s346 = smul.addr %s345, 4
      %s347 = smul.addr %s346, 8
      %s348 = scalar_lea.vmem %s9, %s347
      %p349 = scmp.lt.s32.totalorder %s20, 2
      %s350 = scalar_select %p349, %s20, 2
      %s351 = smul.addr %s350, 8
      %s352 = scalar_lea.vmem %s0, %s351
      %p353 = scmp.lt.s32.totalorder %s20, 2
      %s354 = scalar_select %p353, %s20, 2
      %s355 = smul.addr %s354, 8
      %s356 = scalar_lea.vmem %s1, %s355
      %p357 = scmp.lt.s32.totalorder %s20, 2
      %s358 = scalar_select %p357, %s20, 2
      %s359 = smul.addr %s358, 4
      %s360 = smul.addr %s359, 8
      %s361 = scalar_lea.vmem %s2, %s360
      %p362 = scmp.lt.s32.totalorder %s20, 2
      %s363 = scalar_select %p362, %s20, 2
      %s364 = smul.addr %s363, 4
      %s365 = smul.addr %s364, 8
      %s366 = scalar_lea.vmem %s9, %s365
      %p367 = scmp.eq.s32.totalorder %s20, 0
      // Predicated region
      $region57: #{double_layer_forward.2} parent=55 // pred_check
        %p368 = pneg %p367
      $region58: #{double_layer_forward.2} parent=55 // pred_check_branch
        %370 = sbr.rel (%p368) target = $region60
      $region59: #{double_layer_forward.2} parent=55 // pred_region
        %v371 = vld [vmem:[%s4] sm:$0xff]
        %vm372 = vcmask 130048
        %373 = vst.msk [vmem:[#allocation2] sm:$0xff] %vm372, %v371
      $region60: #{double_layer_forward.2} parent=55 // pred_fallthru
        _
      %v374 = vld [vmem:[%s361] sm:$0xff]
      %v375 = vld [vmem:[%s361 + $0x8] sm:$0xff]
      %v376 = vld [vmem:[%s361 + $0x10] sm:$0xff]
      %v377 = vld [vmem:[%s361 + $0x18] sm:$0xff]
      %v378 = vld [vmem:[%s3] sm:$0xff]
      %v379 = vld [vmem:[%s3 + $0x8] sm:$0xff]
      %v380 = vld [vmem:[%s3 + $0x10] sm:$0xff]
      %v381 = vld [vmem:[%s3 + $0x18] sm:$0xff]
      %vm382 = vcmask 261120
      %v384 = vsel %vm382, %v378, 0
      %v387 = vsel %vm382, %v379, 0
      %v390 = vsel %vm382, %v380, 0
      %v393 = vsel %vm382, %v381, 0
      %395 = vmatprep.subr.mxu0 0.0
      %396 = vmatpush1.msra.mxu0 0.0
      %397 = vmatprep.subr.mxu0 0.0
      %398 = vmatpush1.msra.mxu0 0.0
      %399 = vmatprep.subr.mxu0 0.0
      %400 = vmatpush1.msra.mxu0 0.0
      %401 = vmatprep.subr.mxu0 0.0
      %402 = vmatpush1.msra.mxu0 0.0
      %403 = vmatprep.subr.mxu0 0.0
      %404 = vmatpush1.msra.mxu0 0.0
      %405 = vmatprep.subr.mxu0 0.0
      %406 = vmatpush1.msra.mxu0 0.0
      %407 = vmatprep.subr.mxu0 0.0
      %408 = vmatpush1.msra.mxu0 0.0
      %409 = vmatprep.subr.mxu0 0.0
      %410 = vmatpush1.msra.mxu0 0.0
      %411 = vmatprep.subr.mxu0 0.0
      %412 = vmatpush1.msra.mxu0 0.0
      %413 = vmatprep.subr.mxu0 0.0
      %414 = vmatpush1.msra.mxu0 0.0
      %415 = vmatprep.subr.mxu0 0.0
      %416 = vmatpush1.msra.mxu0 0.0
      %417 = vmatprep.subr.mxu0 0.0
      %418 = vmatpush1.msra.mxu0 0.0
      %419 = vmatprep.subr.mxu0 0.0
      %420 = vmatpush1.msra.mxu0 %v377
      %421 = vmatprep.subr.mxu0 0.0
      %422 = vmatpush1.msra.mxu0 %v376
      %423 = vmatprep.subr.mxu0 0.0
      %424 = vmatpush1.msra.mxu0 %v375
      %425 = vmatprep.subr.mxu0 0.0
      %426 = vmatpush1.msra.mxu0 %v374
      %427 = vmatprep.subr.mxu0 0.0
      %428 = vmatpush2.msra.mxu0 0.0
      %429 = vmatprep.subr.mxu0 0.0
      %430 = vmatpush2.msra.mxu0 0.0
      %431 = vmatprep.subr.mxu0 0.0
      %432 = vmatpush2.msra.mxu0 0.0
      %433 = vmatprep.subr.mxu0 0.0
      %434 = vmatpush2.msra.mxu0 0.0
      %435 = vmatprep.subr.mxu0 0.0
      %436 = vmatpush2.msra.mxu0 0.0
      %437 = vmatprep.subr.mxu0 0.0
      %438 = vmatpush2.msra.mxu0 0.0
      %439 = vmatprep.subr.mxu0 0.0
      %440 = vmatpush2.msra.mxu0 0.0
      %441 = vmatprep.subr.mxu0 0.0
      %442 = vmatpush2.msra.mxu0 0.0
      %443 = vmatprep.subr.mxu0 0.0
      %444 = vmatpush2.msra.mxu0 0.0
      %445 = vmatprep.subr.mxu0 0.0
      %446 = vmatpush2.msra.mxu0 0.0
      %447 = vmatprep.subr.mxu0 0.0
      %448 = vmatpush2.msra.mxu0 0.0
      %449 = vmatprep.subr.mxu0 0.0
      %450 = vmatpush2.msra.mxu0 0.0
      %451 = vmatprep.subr.mxu0 0.0
      %452 = vmatpush2.msra.mxu0 0.0
      %453 = vmatprep.subr.mxu0 0.0
      %454 = vmatpush2.msra.mxu0 0.0
      %455 = vmatprep.subr.mxu0 0.0
      %456 = vmatpush2.msra.mxu0 0.0
      %457 = vmatprep.subr.mxu0 0.0
      %458 = vmatpush2.msra.mxu0 0.0
      %459 = vmatprep.mubr.f32.mxu0 0.0
      %460 = vmatmul.mubr.f32.gmra.mxu0 %v384
      %v461 = vpop.f32.mrf.mxu0
      %v462 = vadd.f32 0.0, %v461
      %v463 = vpop.f32.mrf.mxu0
      %464 = vmatprep.mubr.f32.mxu0 0.0
      %465 = vmatmul.mubr.f32.gmra.mxu0 %v387
      %v466 = vpop.f32.mrf.mxu0
      %v467 = vadd.f32 0.0, %v466
      %v468 = vpop.f32.mrf.mxu0
      %469 = vmatprep.mubr.f32.mxu0 0.0
      %470 = vmatmul.mubr.f32.gmra.mxu0 %v390
      %v471 = vpop.f32.mrf.mxu0
      %v472 = vadd.f32 0.0, %v471
      %v473 = vpop.f32.mrf.mxu0
      %474 = vmatprep.mubr.f32.mxu0 0.0
      %475 = vmatmul.mubr.f32.gmra.mxu0 %v393
      %v476 = vpop.f32.mrf.mxu0
      %v477 = vadd.f32 0.0, %v476
      %v478 = vpop.f32.mrf.mxu0
      %479 = vdwg.mxu0
      %v480 = vlaneseq
      %v481 = vand.u32 %v480, 127
      %v482 = vld [vmem:[%s352] sm:$0xff]
      %483 = vset.pattern.permute.xlu0 0
      %484 = vperm.xlu0 %483, %v482
      %v485 = vpop.permute.xlu0 %484
      %vm486 = vcmp.eq.s32.totalorder %v481, %v485
      %v487 = vld [vmem:[%s356] sm:$0xff]
      %489 = vset.pattern.permute.xlu0 0
      %490 = vperm.xlu0 %489, %v487
      %v491 = vpop.permute.xlu0 %490
      %v493 = vsel %vm486, %v491, 0.0
      %v495 = vsel %vm382, %v493, 0
      %497 = vmatprep.subr.mxu0 0.0
      %498 = vmatpush1.msra.mxu0 0.0
      %499 = vmatprep.subr.mxu0 0.0
      %500 = vmatpush1.msra.mxu0 0.0
      %501 = vmatprep.subr.mxu0 0.0
      %502 = vmatpush1.msra.mxu0 0.0
      %503 = vmatprep.subr.mxu0 0.0
      %504 = vmatpush1.msra.mxu0 0.0
      %505 = vmatprep.subr.mxu0 0.0
      %506 = vmatpush1.msra.mxu0 0.0
      %507 = vmatprep.subr.mxu0 0.0
      %508 = vmatpush1.msra.mxu0 0.0
      %509 = vmatprep.subr.mxu0 0.0
      %510 = vmatpush1.msra.mxu0 0.0
      %511 = vmatprep.subr.mxu0 0.0
      %512 = vmatpush1.msra.mxu0 0.0
      %513 = vmatprep.subr.mxu0 0.0
      %514 = vmatpush1.msra.mxu0 0.0
      %515 = vmatprep.subr.mxu0 0.0
      %516 = vmatpush1.msra.mxu0 0.0
      %517 = vmatprep.subr.mxu0 0.0
      %518 = vmatpush1.msra.mxu0 0.0
      %519 = vmatprep.subr.mxu0 0.0
      %520 = vmatpush1.msra.mxu0 0.0
      %521 = vmatprep.subr.mxu0 0.0
      %522 = vmatpush1.msra.mxu0 %v377
      %523 = vmatprep.subr.mxu0 0.0
      %524 = vmatpush1.msra.mxu0 %v376
      %525 = vmatprep.subr.mxu0 0.0
      %526 = vmatpush1.msra.mxu0 %v375
      %527 = vmatprep.subr.mxu0 0.0
      %528 = vmatpush1.msra.mxu0 %v374
      %529 = vmatprep.subr.mxu0 0.0
      %530 = vmatpush2.msra.mxu0 0.0
      %531 = vmatprep.subr.mxu0 0.0
      %532 = vmatpush2.msra.mxu0 0.0
      %533 = vmatprep.subr.mxu0 0.0
      %534 = vmatpush2.msra.mxu0 0.0
      %535 = vmatprep.subr.mxu0 0.0
      %536 = vmatpush2.msra.mxu0 0.0
      %537 = vmatprep.subr.mxu0 0.0
      %538 = vmatpush2.msra.mxu0 0.0
      %539 = vmatprep.subr.mxu0 0.0
      %540 = vmatpush2.msra.mxu0 0.0
      %541 = vmatprep.subr.mxu0 0.0
      %542 = vmatpush2.msra.mxu0 0.0
      %543 = vmatprep.subr.mxu0 0.0
      %544 = vmatpush2.msra.mxu0 0.0
      %545 = vmatprep.subr.mxu0 0.0
      %546 = vmatpush2.msra.mxu0 0.0
      %547 = vmatprep.subr.mxu0 0.0
      %548 = vmatpush2.msra.mxu0 0.0
      %549 = vmatprep.subr.mxu0 0.0
      %550 = vmatpush2.msra.mxu0 0.0
      %551 = vmatprep.subr.mxu0 0.0
      %552 = vmatpush2.msra.mxu0 0.0
      %553 = vmatprep.subr.mxu0 0.0
      %554 = vmatpush2.msra.mxu0 0.0
      %555 = vmatprep.subr.mxu0 0.0
      %556 = vmatpush2.msra.mxu0 0.0
      %557 = vmatprep.subr.mxu0 0.0
      %558 = vmatpush2.msra.mxu0 0.0
      %559 = vmatprep.subr.mxu0 0.0
      %560 = vmatpush2.msra.mxu0 0.0
      %561 = vmatprep.mubr.f32.mxu0 0.0
      %562 = vmatmul.mubr.f32.gmra.mxu0 %v495
      %v563 = vpop.f32.mrf.mxu0
      %v564 = vadd.f32 0.0, %v563
      %v565 = vpop.f32.mrf.mxu0
      %566 = vdwg.mxu0
      %v567 = vld [vmem:[#allocation2] sm:$0xff]
      %v568 = vld [vmem:[%s5] sm:$0xff]
      %v569 = vld [vmem:[%s7] sm:$0x1]
      %v571 = vlaneseq
      %v572 = vshrl.u32 %v571, 7
      %v573 = vsub.s32 0, %v572
      %v574 = vrot.slane %v569, %v573
      %vm576 = vcmask 64512
      %v578 = vsel %vm576, %v564, 0
      %580 = vmatprep.subr.mxu0 0.0
      %581 = vmatpush1.msra.mxu0 0.0
      %582 = vmatprep.subr.mxu0 0.0
      %583 = vmatpush1.msra.mxu0 0.0
      %584 = vmatprep.subr.mxu0 0.0
      %585 = vmatpush1.msra.mxu0 0.0
      %586 = vmatprep.subr.mxu0 0.0
      %587 = vmatpush1.msra.mxu0 0.0
      %588 = vmatprep.subr.mxu0 0.0
      %589 = vmatpush1.msra.mxu0 0.0
      %590 = vmatprep.subr.mxu0 0.0
      %591 = vmatpush1.msra.mxu0 0.0
      %592 = vmatprep.subr.mxu0 0.0
      %593 = vmatpush1.msra.mxu0 0.0
      %594 = vmatprep.subr.mxu0 0.0
      %595 = vmatpush1.msra.mxu0 0.0
      %596 = vmatprep.subr.mxu0 0.0
      %597 = vmatpush1.msra.mxu0 0.0
      %598 = vmatprep.subr.mxu0 0.0
      %599 = vmatpush1.msra.mxu0 0.0
      %600 = vmatprep.subr.mxu0 0.0
      %601 = vmatpush1.msra.mxu0 0.0
      %602 = vmatprep.subr.mxu0 0.0
      %603 = vmatpush1.msra.mxu0 0.0
      %604 = vmatprep.subr.mxu0 0.0
      %605 = vmatpush1.msra.mxu0 0.0
      %606 = vmatprep.subr.mxu0 0.0
      %607 = vmatpush1.msra.mxu0 0.0
      %608 = vmatprep.subr.mxu0 0.0
      %609 = vmatpush1.msra.mxu0 0.0
      %610 = vmatprep.subr.mxu0 0.0
      %611 = vmatpush1.msra.mxu0 %v568
      %612 = vmatprep.subr.mxu0 0.0
      %613 = vmatpush2.msra.mxu0 0.0
      %614 = vmatprep.subr.mxu0 0.0
      %615 = vmatpush2.msra.mxu0 0.0
      %616 = vmatprep.subr.mxu0 0.0
      %617 = vmatpush2.msra.mxu0 0.0
      %618 = vmatprep.subr.mxu0 0.0
      %619 = vmatpush2.msra.mxu0 0.0
      %620 = vmatprep.subr.mxu0 0.0
      %621 = vmatpush2.msra.mxu0 0.0
      %622 = vmatprep.subr.mxu0 0.0
      %623 = vmatpush2.msra.mxu0 0.0
      %624 = vmatprep.subr.mxu0 0.0
      %625 = vmatpush2.msra.mxu0 0.0
      %626 = vmatprep.subr.mxu0 0.0
      %627 = vmatpush2.msra.mxu0 0.0
      %628 = vmatprep.subr.mxu0 0.0
      %629 = vmatpush2.msra.mxu0 0.0
      %630 = vmatprep.subr.mxu0 0.0
      %631 = vmatpush2.msra.mxu0 0.0
      %632 = vmatprep.subr.mxu0 0.0
      %633 = vmatpush2.msra.mxu0 0.0
      %634 = vmatprep.subr.mxu0 0.0
      %635 = vmatpush2.msra.mxu0 0.0
      %636 = vmatprep.subr.mxu0 0.0
      %637 = vmatpush2.msra.mxu0 0.0
      %638 = vmatprep.subr.mxu0 0.0
      %639 = vmatpush2.msra.mxu0 0.0
      %640 = vmatprep.subr.mxu0 0.0
      %641 = vmatpush2.msra.mxu0 0.0
      %642 = vmatprep.subr.mxu0 0.0
      %643 = vmatpush2.msra.mxu0 0.0
      %644 = vmatprep.mubr.f32.mxu0 0.0
      %645 = vmatmul.mubr.f32.gmra.mxu0 %v578
      %v646 = vpop.f32.mrf.mxu0
      %v647 = vadd.f32 %v574, %v646
      %v648 = vpop.f32.mrf.mxu0
      %649 = vdwg.mxu0
      %v650 = vld [vmem:[%s6] sm:$0xff]
      %v651 = vld [vmem:[%s6 + $0x8] sm:$0xff]
      %v652 = vld [vmem:[%s8] sm:$0x1]
      %v654 = vlaneseq
      %v655 = vshrl.u32 %v654, 7
      %v656 = vsub.s32 0, %v655
      %v657 = vrot.slane %v652, %v656
      %vm659 = vcmask 130048
      %v661 = vsel %vm659, %v567, 0
      %663 = vmatprep.subr.mxu0 0.0
      %664 = vmatpush1.msra.mxu0 0.0
      %665 = vmatprep.subr.mxu0 0.0
      %666 = vmatpush1.msra.mxu0 0.0
      %667 = vmatprep.subr.mxu0 0.0
      %668 = vmatpush1.msra.mxu0 0.0
      %669 = vmatprep.subr.mxu0 0.0
      %670 = vmatpush1.msra.mxu0 0.0
      %671 = vmatprep.subr.mxu0 0.0
      %672 = vmatpush1.msra.mxu0 0.0
      %673 = vmatprep.subr.mxu0 0.0
      %674 = vmatpush1.msra.mxu0 0.0
      %675 = vmatprep.subr.mxu0 0.0
      %676 = vmatpush1.msra.mxu0 0.0
      %677 = vmatprep.subr.mxu0 0.0
      %678 = vmatpush1.msra.mxu0 0.0
      %679 = vmatprep.subr.mxu0 0.0
      %680 = vmatpush1.msra.mxu0 0.0
      %681 = vmatprep.subr.mxu0 0.0
      %682 = vmatpush1.msra.mxu0 0.0
      %683 = vmatprep.subr.mxu0 0.0
      %684 = vmatpush1.msra.mxu0 0.0
      %685 = vmatprep.subr.mxu0 0.0
      %686 = vmatpush1.msra.mxu0 0.0
      %687 = vmatprep.subr.mxu0 0.0
      %688 = vmatpush1.msra.mxu0 0.0
      %689 = vmatprep.subr.mxu0 0.0
      %690 = vmatpush1.msra.mxu0 0.0
      %691 = vmatprep.subr.mxu0 0.0
      %692 = vmatpush1.msra.mxu0 %v651
      %693 = vmatprep.subr.mxu0 0.0
      %694 = vmatpush1.msra.mxu0 %v650
      %695 = vmatprep.subr.mxu0 0.0
      %696 = vmatpush2.msra.mxu0 0.0
      %697 = vmatprep.subr.mxu0 0.0
      %698 = vmatpush2.msra.mxu0 0.0
      %699 = vmatprep.subr.mxu0 0.0
      %700 = vmatpush2.msra.mxu0 0.0
      %701 = vmatprep.subr.mxu0 0.0
      %702 = vmatpush2.msra.mxu0 0.0
      %703 = vmatprep.subr.mxu0 0.0
      %704 = vmatpush2.msra.mxu0 0.0
      %705 = vmatprep.subr.mxu0 0.0
      %706 = vmatpush2.msra.mxu0 0.0
      %707 = vmatprep.subr.mxu0 0.0
      %708 = vmatpush2.msra.mxu0 0.0
      %709 = vmatprep.subr.mxu0 0.0
      %710 = vmatpush2.msra.mxu0 0.0
      %711 = vmatprep.subr.mxu0 0.0
      %712 = vmatpush2.msra.mxu0 0.0
      %713 = vmatprep.subr.mxu0 0.0
      %714 = vmatpush2.msra.mxu0 0.0
      %715 = vmatprep.subr.mxu0 0.0
      %716 = vmatpush2.msra.mxu0 0.0
      %717 = vmatprep.subr.mxu0 0.0
      %718 = vmatpush2.msra.mxu0 0.0
      %719 = vmatprep.subr.mxu0 0.0
      %720 = vmatpush2.msra.mxu0 0.0
      %721 = vmatprep.subr.mxu0 0.0
      %722 = vmatpush2.msra.mxu0 0.0
      %723 = vmatprep.subr.mxu0 0.0
      %724 = vmatpush2.msra.mxu0 0.0
      %725 = vmatprep.subr.mxu0 0.0
      %726 = vmatpush2.msra.mxu0 0.0
      %727 = vmatprep.mubr.f32.mxu0 0.0
      %728 = vmatmul.mubr.f32.gmra.mxu0 %v661
      %v729 = vpop.f32.mrf.mxu0
      %v730 = vadd.f32 %v657, %v729
      %v731 = vpop.f32.mrf.mxu0
      %732 = vdwg.mxu0
      %s733 = scalar_lea.vmem %s5, 8
      %v734 = vld [vmem:[%s733] sm:$0xff]
      %s735 = scalar_lea.vmem %s7, 1
      %v736 = vld [vmem:[%s735] sm:$0x1]
      %v738 = vlaneseq
      %v739 = vshrl.u32 %v738, 7
      %v740 = vsub.s32 0, %v739
      %v741 = vrot.slane %v736, %v740
      %743 = vmatprep.subr.mxu0 0.0
      %744 = vmatpush1.msra.mxu0 0.0
      %745 = vmatprep.subr.mxu0 0.0
      %746 = vmatpush1.msra.mxu0 0.0
      %747 = vmatprep.subr.mxu0 0.0
      %748 = vmatpush1.msra.mxu0 0.0
      %749 = vmatprep.subr.mxu0 0.0
      %750 = vmatpush1.msra.mxu0 0.0
      %751 = vmatprep.subr.mxu0 0.0
      %752 = vmatpush1.msra.mxu0 0.0
      %753 = vmatprep.subr.mxu0 0.0
      %754 = vmatpush1.msra.mxu0 0.0
      %755 = vmatprep.subr.mxu0 0.0
      %756 = vmatpush1.msra.mxu0 0.0
      %757 = vmatprep.subr.mxu0 0.0
      %758 = vmatpush1.msra.mxu0 0.0
      %759 = vmatprep.subr.mxu0 0.0
      %760 = vmatpush1.msra.mxu0 0.0
      %761 = vmatprep.subr.mxu0 0.0
      %762 = vmatpush1.msra.mxu0 0.0
      %763 = vmatprep.subr.mxu0 0.0
      %764 = vmatpush1.msra.mxu0 0.0
      %765 = vmatprep.subr.mxu0 0.0
      %766 = vmatpush1.msra.mxu0 0.0
      %767 = vmatprep.subr.mxu0 0.0
      %768 = vmatpush1.msra.mxu0 0.0
      %769 = vmatprep.subr.mxu0 0.0
      %770 = vmatpush1.msra.mxu0 0.0
      %771 = vmatprep.subr.mxu0 0.0
      %772 = vmatpush1.msra.mxu0 0.0
      %773 = vmatprep.subr.mxu0 0.0
      %774 = vmatpush1.msra.mxu0 %v734
      %775 = vmatprep.subr.mxu0 0.0
      %776 = vmatpush2.msra.mxu0 0.0
      %777 = vmatprep.subr.mxu0 0.0
      %778 = vmatpush2.msra.mxu0 0.0
      %779 = vmatprep.subr.mxu0 0.0
      %780 = vmatpush2.msra.mxu0 0.0
      %781 = vmatprep.subr.mxu0 0.0
      %782 = vmatpush2.msra.mxu0 0.0
      %783 = vmatprep.subr.mxu0 0.0
      %784 = vmatpush2.msra.mxu0 0.0
      %785 = vmatprep.subr.mxu0 0.0
      %786 = vmatpush2.msra.mxu0 0.0
      %787 = vmatprep.subr.mxu0 0.0
      %788 = vmatpush2.msra.mxu0 0.0
      %789 = vmatprep.subr.mxu0 0.0
      %790 = vmatpush2.msra.mxu0 0.0
      %791 = vmatprep.subr.mxu0 0.0
      %792 = vmatpush2.msra.mxu0 0.0
      %793 = vmatprep.subr.mxu0 0.0
      %794 = vmatpush2.msra.mxu0 0.0
      %795 = vmatprep.subr.mxu0 0.0
      %796 = vmatpush2.msra.mxu0 0.0
      %797 = vmatprep.subr.mxu0 0.0
      %798 = vmatpush2.msra.mxu0 0.0
      %799 = vmatprep.subr.mxu0 0.0
      %800 = vmatpush2.msra.mxu0 0.0
      %801 = vmatprep.subr.mxu0 0.0
      %802 = vmatpush2.msra.mxu0 0.0
      %803 = vmatprep.subr.mxu0 0.0
      %804 = vmatpush2.msra.mxu0 0.0
      %805 = vmatprep.subr.mxu0 0.0
      %806 = vmatpush2.msra.mxu0 0.0
      %807 = vmatprep.mubr.f32.mxu0 0.0
      %808 = vmatmul.mubr.f32.gmra.mxu0 %v578
      %v809 = vpop.f32.mrf.mxu0
      %v810 = vadd.f32 %v741, %v809
      %v811 = vpop.f32.mrf.mxu0
      %812 = vdwg.mxu0
      %s813 = scalar_lea.vmem %s6, 16
      %v814 = vld [vmem:[%s813] sm:$0xff]
      %v815 = vld [vmem:[%s813 + $0x8] sm:$0xff]
      %s816 = scalar_lea.vmem %s8, 1
      %v817 = vld [vmem:[%s816] sm:$0x1]
      %v819 = vlaneseq
      %v820 = vshrl.u32 %v819, 7
      %v821 = vsub.s32 0, %v820
      %v822 = vrot.slane %v817, %v821
      %824 = vmatprep.subr.mxu0 0.0
      %825 = vmatpush1.msra.mxu0 0.0
      %826 = vmatprep.subr.mxu0 0.0
      %827 = vmatpush1.msra.mxu0 0.0
      %828 = vmatprep.subr.mxu0 0.0
      %829 = vmatpush1.msra.mxu0 0.0
      %830 = vmatprep.subr.mxu0 0.0
      %831 = vmatpush1.msra.mxu0 0.0
      %832 = vmatprep.subr.mxu0 0.0
      %833 = vmatpush1.msra.mxu0 0.0
      %834 = vmatprep.subr.mxu0 0.0
      %835 = vmatpush1.msra.mxu0 0.0
      %836 = vmatprep.subr.mxu0 0.0
      %837 = vmatpush1.msra.mxu0 0.0
      %838 = vmatprep.subr.mxu0 0.0
      %839 = vmatpush1.msra.mxu0 0.0
      %840 = vmatprep.subr.mxu0 0.0
      %841 = vmatpush1.msra.mxu0 0.0
      %842 = vmatprep.subr.mxu0 0.0
      %843 = vmatpush1.msra.mxu0 0.0
      %844 = vmatprep.subr.mxu0 0.0
      %845 = vmatpush1.msra.mxu0 0.0
      %846 = vmatprep.subr.mxu0 0.0
      %847 = vmatpush1.msra.mxu0 0.0
      %848 = vmatprep.subr.mxu0 0.0
      %849 = vmatpush1.msra.mxu0 0.0
      %850 = vmatprep.subr.mxu0 0.0
      %851 = vmatpush1.msra.mxu0 0.0
      %852 = vmatprep.subr.mxu0 0.0
      %853 = vmatpush1.msra.mxu0 %v815
      %854 = vmatprep.subr.mxu0 0.0
      %855 = vmatpush1.msra.mxu0 %v814
      %856 = vmatprep.subr.mxu0 0.0
      %857 = vmatpush2.msra.mxu0 0.0
      %858 = vmatprep.subr.mxu0 0.0
      %859 = vmatpush2.msra.mxu0 0.0
      %860 = vmatprep.subr.mxu0 0.0
      %861 = vmatpush2.msra.mxu0 0.0
      %862 = vmatprep.subr.mxu0 0.0
      %863 = vmatpush2.msra.mxu0 0.0
      %864 = vmatprep.subr.mxu0 0.0
      %865 = vmatpush2.msra.mxu0 0.0
      %866 = vmatprep.subr.mxu0 0.0
      %867 = vmatpush2.msra.mxu0 0.0
      %868 = vmatprep.subr.mxu0 0.0
      %869 = vmatpush2.msra.mxu0 0.0
      %870 = vmatprep.subr.mxu0 0.0
      %871 = vmatpush2.msra.mxu0 0.0
      %872 = vmatprep.subr.mxu0 0.0
      %873 = vmatpush2.msra.mxu0 0.0
      %874 = vmatprep.subr.mxu0 0.0
      %875 = vmatpush2.msra.mxu0 0.0
      %876 = vmatprep.subr.mxu0 0.0
      %877 = vmatpush2.msra.mxu0 0.0
      %878 = vmatprep.subr.mxu0 0.0
      %879 = vmatpush2.msra.mxu0 0.0
      %880 = vmatprep.subr.mxu0 0.0
      %881 = vmatpush2.msra.mxu0 0.0
      %882 = vmatprep.subr.mxu0 0.0
      %883 = vmatpush2.msra.mxu0 0.0
      %884 = vmatprep.subr.mxu0 0.0
      %885 = vmatpush2.msra.mxu0 0.0
      %886 = vmatprep.subr.mxu0 0.0
      %887 = vmatpush2.msra.mxu0 0.0
      %888 = vmatprep.mubr.f32.mxu0 0.0
      %889 = vmatmul.mubr.f32.gmra.mxu0 %v661
      %v890 = vpop.f32.mrf.mxu0
      %v891 = vadd.f32 %v822, %v890
      %v892 = vpop.f32.mrf.mxu0
      %893 = vdwg.mxu0
      %s894 = scalar_lea.vmem %s5, 16
      %v895 = vld [vmem:[%s894] sm:$0xff]
      %s896 = scalar_lea.vmem %s7, 2
      %v897 = vld [vmem:[%s896] sm:$0x1]
      %v899 = vlaneseq
      %v900 = vshrl.u32 %v899, 7
      %v901 = vsub.s32 0, %v900
      %v902 = vrot.slane %v897, %v901
      %904 = vmatprep.subr.mxu0 0.0
      %905 = vmatpush1.msra.mxu0 0.0
      %906 = vmatprep.subr.mxu0 0.0
      %907 = vmatpush1.msra.mxu0 0.0
      %908 = vmatprep.subr.mxu0 0.0
      %909 = vmatpush1.msra.mxu0 0.0
      %910 = vmatprep.subr.mxu0 0.0
      %911 = vmatpush1.msra.mxu0 0.0
      %912 = vmatprep.subr.mxu0 0.0
      %913 = vmatpush1.msra.mxu0 0.0
      %914 = vmatprep.subr.mxu0 0.0
      %915 = vmatpush1.msra.mxu0 0.0
      %916 = vmatprep.subr.mxu0 0.0
      %917 = vmatpush1.msra.mxu0 0.0
      %918 = vmatprep.subr.mxu0 0.0
      %919 = vmatpush1.msra.mxu0 0.0
      %920 = vmatprep.subr.mxu0 0.0
      %921 = vmatpush1.msra.mxu0 0.0
      %922 = vmatprep.subr.mxu0 0.0
      %923 = vmatpush1.msra.mxu0 0.0
      %924 = vmatprep.subr.mxu0 0.0
      %925 = vmatpush1.msra.mxu0 0.0
      %926 = vmatprep.subr.mxu0 0.0
      %927 = vmatpush1.msra.mxu0 0.0
      %928 = vmatprep.subr.mxu0 0.0
      %929 = vmatpush1.msra.mxu0 0.0
      %930 = vmatprep.subr.mxu0 0.0
      %931 = vmatpush1.msra.mxu0 0.0
      %932 = vmatprep.subr.mxu0 0.0
      %933 = vmatpush1.msra.mxu0 0.0
      %934 = vmatprep.subr.mxu0 0.0
      %935 = vmatpush1.msra.mxu0 %v895
      %936 = vmatprep.subr.mxu0 0.0
      %937 = vmatpush2.msra.mxu0 0.0
      %938 = vmatprep.subr.mxu0 0.0
      %939 = vmatpush2.msra.mxu0 0.0
      %940 = vmatprep.subr.mxu0 0.0
      %941 = vmatpush2.msra.mxu0 0.0
      %942 = vmatprep.subr.mxu0 0.0
      %943 = vmatpush2.msra.mxu0 0.0
      %944 = vmatprep.subr.mxu0 0.0
      %945 = vmatpush2.msra.mxu0 0.0
      %946 = vmatprep.subr.mxu0 0.0
      %947 = vmatpush2.msra.mxu0 0.0
      %948 = vmatprep.subr.mxu0 0.0
      %949 = vmatpush2.msra.mxu0 0.0
      %950 = vmatprep.subr.mxu0 0.0
      %951 = vmatpush2.msra.mxu0 0.0
      %952 = vmatprep.subr.mxu0 0.0
      %953 = vmatpush2.msra.mxu0 0.0
      %954 = vmatprep.subr.mxu0 0.0
      %955 = vmatpush2.msra.mxu0 0.0
      %956 = vmatprep.subr.mxu0 0.0
      %957 = vmatpush2.msra.mxu0 0.0
      %958 = vmatprep.subr.mxu0 0.0
      %959 = vmatpush2.msra.mxu0 0.0
      %960 = vmatprep.subr.mxu0 0.0
      %961 = vmatpush2.msra.mxu0 0.0
      %962 = vmatprep.subr.mxu0 0.0
      %963 = vmatpush2.msra.mxu0 0.0
      %964 = vmatprep.subr.mxu0 0.0
      %965 = vmatpush2.msra.mxu0 0.0
      %966 = vmatprep.subr.mxu0 0.0
      %967 = vmatpush2.msra.mxu0 0.0
      %968 = vmatprep.mubr.f32.mxu0 0.0
      %969 = vmatmul.mubr.f32.gmra.mxu0 %v578
      %v970 = vpop.f32.mrf.mxu0
      %v971 = vadd.f32 %v902, %v970
      %v972 = vpop.f32.mrf.mxu0
      %973 = vdwg.mxu0
      %s974 = scalar_lea.vmem %s6, 32
      %v975 = vld [vmem:[%s974] sm:$0xff]
      %v976 = vld [vmem:[%s974 + $0x8] sm:$0xff]
      %s977 = scalar_lea.vmem %s8, 2
      %v978 = vld [vmem:[%s977] sm:$0x1]
      %v980 = vlaneseq
      %v981 = vshrl.u32 %v980, 7
      %v982 = vsub.s32 0, %v981
      %v983 = vrot.slane %v978, %v982
      %985 = vmatprep.subr.mxu0 0.0
      %986 = vmatpush1.msra.mxu0 0.0
      %987 = vmatprep.subr.mxu0 0.0
      %988 = vmatpush1.msra.mxu0 0.0
      %989 = vmatprep.subr.mxu0 0.0
      %990 = vmatpush1.msra.mxu0 0.0
      %991 = vmatprep.subr.mxu0 0.0
      %992 = vmatpush1.msra.mxu0 0.0
      %993 = vmatprep.subr.mxu0 0.0
      %994 = vmatpush1.msra.mxu0 0.0
      %995 = vmatprep.subr.mxu0 0.0
      %996 = vmatpush1.msra.mxu0 0.0
      %997 = vmatprep.subr.mxu0 0.0
      %998 = vmatpush1.msra.mxu0 0.0
      %999 = vmatprep.subr.mxu0 0.0
      %1000 = vmatpush1.msra.mxu0 0.0
      %1001 = vmatprep.subr.mxu0 0.0
      %1002 = vmatpush1.msra.mxu0 0.0
      %1003 = vmatprep.subr.mxu0 0.0
      %1004 = vmatpush1.msra.mxu0 0.0
      %1005 = vmatprep.subr.mxu0 0.0
      %1006 = vmatpush1.msra.mxu0 0.0
      %1007 = vmatprep.subr.mxu0 0.0
      %1008 = vmatpush1.msra.mxu0 0.0
      %1009 = vmatprep.subr.mxu0 0.0
      %1010 = vmatpush1.msra.mxu0 0.0
      %1011 = vmatprep.subr.mxu0 0.0
      %1012 = vmatpush1.msra.mxu0 0.0
      %1013 = vmatprep.subr.mxu0 0.0
      %1014 = vmatpush1.msra.mxu0 %v976
      %1015 = vmatprep.subr.mxu0 0.0
      %1016 = vmatpush1.msra.mxu0 %v975
      %1017 = vmatprep.subr.mxu0 0.0
      %1018 = vmatpush2.msra.mxu0 0.0
      %1019 = vmatprep.subr.mxu0 0.0
      %1020 = vmatpush2.msra.mxu0 0.0
      %1021 = vmatprep.subr.mxu0 0.0
      %1022 = vmatpush2.msra.mxu0 0.0
      %1023 = vmatprep.subr.mxu0 0.0
      %1024 = vmatpush2.msra.mxu0 0.0
      %1025 = vmatprep.subr.mxu0 0.0
      %1026 = vmatpush2.msra.mxu0 0.0
      %1027 = vmatprep.subr.mxu0 0.0
      %1028 = vmatpush2.msra.mxu0 0.0
      %1029 = vmatprep.subr.mxu0 0.0
      %1030 = vmatpush2.msra.mxu0 0.0
      %1031 = vmatprep.subr.mxu0 0.0
      %1032 = vmatpush2.msra.mxu0 0.0
      %1033 = vmatprep.subr.mxu0 0.0
      %1034 = vmatpush2.msra.mxu0 0.0
      %1035 = vmatprep.subr.mxu0 0.0
      %1036 = vmatpush2.msra.mxu0 0.0
      %1037 = vmatprep.subr.mxu0 0.0
      %1038 = vmatpush2.msra.mxu0 0.0
      %1039 = vmatprep.subr.mxu0 0.0
      %1040 = vmatpush2.msra.mxu0 0.0
      %1041 = vmatprep.subr.mxu0 0.0
      %1042 = vmatpush2.msra.mxu0 0.0
      %1043 = vmatprep.subr.mxu0 0.0
      %1044 = vmatpush2.msra.mxu0 0.0
      %1045 = vmatprep.subr.mxu0 0.0
      %1046 = vmatpush2.msra.mxu0 0.0
      %1047 = vmatprep.subr.mxu0 0.0
      %1048 = vmatpush2.msra.mxu0 0.0
      %1049 = vmatprep.mubr.f32.mxu0 0.0
      %1050 = vmatmul.mubr.f32.gmra.mxu0 %v661
      %v1051 = vpop.f32.mrf.mxu0
      %v1052 = vadd.f32 %v983, %v1051
      %v1053 = vpop.f32.mrf.mxu0
      %1054 = vdwg.mxu0
      %v1055 = vadd.f32 %v647, %v730
      %v1056 = vxor.u32 %v1055, 2147483648
      %v1057 = vmul.f32 %v1056, 1.442695
      %v1058 = vpow.pop %v1057
      %v1059 = vadd.f32 %v1058, 1.0
      %v1060 = vrcp.pop %v1059
      %v1061 = vmul.f32 1.0, %v1060
      %v1062 = vadd.f32 %v810, %v891
      %v1063 = vxor.u32 %v1062, 2147483648
      %v1064 = vmul.f32 %v1063, 1.442695
      %v1065 = vpow.pop %v1064
      %v1066 = vadd.f32 %v1065, 1.0
      %v1067 = vrcp.pop %v1066
      %v1068 = vmul.f32 1.0, %v1067
      %v1069 = vmul.f32 %v1061, %v1052
      %v1070 = vadd.f32 %v971, %v1069
      %v1071 = vtanh.pop %v1070
      %v1072 = vsub.f32 1.0, %v1068
      %v1073 = vmul.f32 %v1072, %v1071
      %v1074 = vmul.f32 %v1068, %v567
      %v1075 = vadd.f32 %v1073, %v1074
      %1076 = vst.msk [vmem:[#allocation2] sm:$0xff] %vm659, %v1075
      %v1078 = vsel %vm576, %v462, 0
      %v1081 = vsel %vm576, %v467, 0
      %v1084 = vsel %vm576, %v472, 0
      %v1087 = vsel %vm576, %v477, 0
      %1089 = vmatprep.subr.mxu0 0.0
      %1090 = vmatpush1.msra.mxu0 0.0
      %1091 = vmatprep.subr.mxu0 0.0
      %1092 = vmatpush1.msra.mxu0 0.0
      %1093 = vmatprep.subr.mxu0 0.0
      %1094 = vmatpush1.msra.mxu0 0.0
      %1095 = vmatprep.subr.mxu0 0.0
      %1096 = vmatpush1.msra.mxu0 0.0
      %1097 = vmatprep.subr.mxu0 0.0
      %1098 = vmatpush1.msra.mxu0 0.0
      %1099 = vmatprep.subr.mxu0 0.0
      %1100 = vmatpush1.msra.mxu0 0.0
      %1101 = vmatprep.subr.mxu0 0.0
      %1102 = vmatpush1.msra.mxu0 0.0
      %1103 = vmatprep.subr.mxu0 0.0
      %1104 = vmatpush1.msra.mxu0 0.0
      %1105 = vmatprep.subr.mxu0 0.0
      %1106 = vmatpush1.msra.mxu0 0.0
      %1107 = vmatprep.subr.mxu0 0.0
      %1108 = vmatpush1.msra.mxu0 0.0
      %1109 = vmatprep.subr.mxu0 0.0
      %1110 = vmatpush1.msra.mxu0 0.0
      %1111 = vmatprep.subr.mxu0 0.0
      %1112 = vmatpush1.msra.mxu0 0.0
      %1113 = vmatprep.subr.mxu0 0.0
      %1114 = vmatpush1.msra.mxu0 0.0
      %1115 = vmatprep.subr.mxu0 0.0
      %1116 = vmatpush1.msra.mxu0 0.0
      %1117 = vmatprep.subr.mxu0 0.0
      %1118 = vmatpush1.msra.mxu0 0.0
      %1119 = vmatprep.subr.mxu0 0.0
      %1120 = vmatpush1.msra.mxu0 %v1075
      %1121 = vmatprep.subr.mxu0 0.0
      %1122 = vmatpush2.msra.mxu0 0.0
      %1123 = vmatprep.subr.mxu0 0.0
      %1124 = vmatpush2.msra.mxu0 0.0
      %1125 = vmatprep.subr.mxu0 0.0
      %1126 = vmatpush2.msra.mxu0 0.0
      %1127 = vmatprep.subr.mxu0 0.0
      %1128 = vmatpush2.msra.mxu0 0.0
      %1129 = vmatprep.subr.mxu0 0.0
      %1130 = vmatpush2.msra.mxu0 0.0
      %1131 = vmatprep.subr.mxu0 0.0
      %1132 = vmatpush2.msra.mxu0 0.0
      %1133 = vmatprep.subr.mxu0 0.0
      %1134 = vmatpush2.msra.mxu0 0.0
      %1135 = vmatprep.subr.mxu0 0.0
      %1136 = vmatpush2.msra.mxu0 0.0
      %1137 = vmatprep.subr.mxu0 0.0
      %1138 = vmatpush2.msra.mxu0 0.0
      %1139 = vmatprep.subr.mxu0 0.0
      %1140 = vmatpush2.msra.mxu0 0.0
      %1141 = vmatprep.subr.mxu0 0.0
      %1142 = vmatpush2.msra.mxu0 0.0
      %1143 = vmatprep.subr.mxu0 0.0
      %1144 = vmatpush2.msra.mxu0 0.0
      %1145 = vmatprep.subr.mxu0 0.0
      %1146 = vmatpush2.msra.mxu0 0.0
      %1147 = vmatprep.subr.mxu0 0.0
      %1148 = vmatpush2.msra.mxu0 0.0
      %1149 = vmatprep.subr.mxu0 0.0
      %1150 = vmatpush2.msra.mxu0 0.0
      %1151 = vmatprep.subr.mxu0 0.0
      %1152 = vmatpush2.msra.mxu0 0.0
      %1153 = vmatprep.mubr.f32.mxu0 0.0
      %1154 = vmatmul.mubr.f32.gmra.mxu0 %v1078
      %v1155 = vpop.f32.mrf.mxu0
      %v1156 = vadd.f32 0.0, %v1155
      %v1157 = vpop.f32.mrf.mxu0
      %1158 = vmatprep.mubr.f32.mxu0 0.0
      %1159 = vmatmul.mubr.f32.gmra.mxu0 %v1081
      %v1160 = vpop.f32.mrf.mxu0
      %v1161 = vadd.f32 0.0, %v1160
      %v1162 = vpop.f32.mrf.mxu0
      %1163 = vmatprep.mubr.f32.mxu0 0.0
      %1164 = vmatmul.mubr.f32.gmra.mxu0 %v1084
      %v1165 = vpop.f32.mrf.mxu0
      %v1166 = vadd.f32 0.0, %v1165
      %v1167 = vpop.f32.mrf.mxu0
      %1168 = vmatprep.mubr.f32.mxu0 0.0
      %1169 = vmatmul.mubr.f32.gmra.mxu0 %v1087
      %v1170 = vpop.f32.mrf.mxu0
      %v1171 = vadd.f32 0.0, %v1170
      %v1172 = vpop.f32.mrf.mxu0
      %1173 = vdwg.mxu0
      %1174 = vst.msk [vmem:[%s366] sm:$0xff] %vm659, %v1156
      %1175 = vst.msk [vmem:[%s366 + $0x8] sm:$0xff] %vm659, %v1161
      %1176 = vst.msk [vmem:[%s366 + $0x10] sm:$0xff] %vm659, %v1166
      %1177 = vst.msk [vmem:[%s366 + $0x18] sm:$0xff] %vm659, %v1171
      %p1178 = scmp.lt.s32.totalorder %s20, 2
      %s1179 = scalar_select %p1178, %s20, 2
      %s1180 = smul.addr %s1179, 4
      %s1181 = smul.addr %s1180, 8
      %s1182 = scalar_lea.vmem %s9, %s1181
      // Predicated region
      $region61: #{double_layer_forward.2} parent=55 // pred_check
        %p1183 = pneg %p242
      $region62: #{double_layer_forward.2} parent=55 // pred_check_branch
        %1185 = sbr.rel (%p1183) target = $region64
      $region63: #{double_layer_forward.2} parent=55 // pred_region
        _
      $region64: #{double_layer_forward.2} parent=55 // pred_fallthru
        _
    $region56: #{double_layer_forward.2} parent=5 // pred_fallthru
      _
    %p1186 = scmp.le.s32.totalorder 2, %s15
    // Predicated region
    $region65: #{double_layer_forward.2} parent=5 // pred_check
      %p1187 = pneg %p1186
    $region66: #{double_layer_forward.2} parent=5 // pred_check_branch
      %1189 = sbr.rel (%p1187) target = $region68
    $region67: #{double_layer_forward.2} parent=5 // pred_region
      %s1190 = ssub.s32 %s15, 2
      // Predicated region
      $region69: #{double_layer_forward.2} parent=67 // pred_check
        %p1191 = pneg %p248
      $region70: #{double_layer_forward.2} parent=67 // pred_check_branch
        %1193 = sbr.rel (%p1191) target = $region72
      $region71: #{double_layer_forward.2} parent=67 // pred_region
        %p1194 = scmp.lt.s32.totalorder %s21, 2
        %s1195 = scalar_select %p1194, %s21, 2
        %s1196 = smul.addr %s1195, 4
        %s1197 = smul.addr %s1196, 8
        %s1198 = scalar_lea.vmem %s9, %s1197
      $region72: #{double_layer_forward.2} parent=67 // pred_fallthru
        _
    $region68: #{double_layer_forward.2} parent=5 // pred_fallthru
      _
  $region6: #{double_layer_forward.2} parent=0 // loop_footer
    %s19 = sadd.s32 1, %s15
  $region7: #{double_layer_forward.2} parent=0 // loop_footer_branch
    %14 = sbr.rel target = $region3
  $region8: #{double_layer_forward.2} parent=0 // loop_exit
    _

// kernel: double_layer_forward.3
$region0: #{double_layer_forward.3}
  #allocation0 [shape = 'u32[]', space=smem, size = 0x4, offset = 0x4, fixed_abs, tag = 'smem constant byte address 0x4 - core index']
  #allocation1 [shape = 'u32[144,128]{1,0:T(1,128)}', space=vmem, size = 0x12000, scoped, tag = 'internal scratch']
  #allocation2 [shape = 'f32[16,8]{1,0:T(8,128)}', space=vmem, size = 0x2000, scoped, tag = 'scratch operand']
  %s0 = inlined_call_operand.vmem [shape: s32[3,16,1], index: 0, kind: input, shape index: {}]
  %s1 = inlined_call_operand.vmem [shape: f32[3,16,1], index: 1, kind: input, shape index: {}]
  %s2 = inlined_call_operand.vmem [shape: f32[3,32,16], index: 2, kind: input, shape index: {}]
  %s3 = inlined_call_operand.vmem [shape: f32[1,32,32], index: 3, kind: input, shape index: {}]
  %s4 = inlined_call_operand.vmem [shape: f32[16,8], index: 4, kind: input, shape index: {}]
  %s5 = inlined_call_operand.vmem [shape: f32[3,16,8], index: 5, kind: input, shape index: {}]
  %s6 = inlined_call_operand.vmem [shape: f32[3,8,8], index: 6, kind: input, shape index: {}]
  %s7 = inlined_call_operand.vmem [shape: f32[3,1,8], index: 7, kind: input, shape index: {}]
  %s8 = inlined_call_operand.vmem [shape: f32[3,1,8], index: 8, kind: input, shape index: {}]
  %s9 = inlined_call_operand.vmem [shape: f32[1,32,8], index: 9, kind: output, shape index: {}]
  %s10 = sld [smem:[#allocation0]]
  $region73: #{double_layer_forward.3} parent=0
    _
  %s12 = ssub.s32 1, %s10
  %s13 = scalar_select 0, %s12, %s10
  loop: start=0, step=1, limit=5
  $region2: #{double_layer_forward.3} parent=0 // loop_pre_header
    _
  $region3: #{double_layer_forward.3} parent=0 // loop_header
    %s15 = sphi 0, %s19
    %p16 = scmp.ge.s32.totalorder %s15, 5
    %s25 = sphi 0, %s27
    %s28 = sphi 0, %s25
    %s29 = sphi 0, %s28
    %s45 = sphi 0, %s29
    %s51 = sphi 0, %s53
    %s54 = sphi 0, %s51
    %s55 = sphi 0, %s54
    %s71 = sphi 0, %s55
    %s77 = sphi 0, %s79
    %s80 = sphi 0, %s77
    %s81 = sphi 0, %s80
    %s97 = sphi 0, %s81
    %s101 = sphi 0, %s101
    %s103 = sphi 0, %s101
    %s104 = sphi 0, %s103
    %s118 = sphi 0, %s104
    %s122 = sphi 0, %s122
    %s124 = sphi 0, %s122
    %s125 = sphi 0, %s124
    %s139 = sphi 0, %s125
    %s143 = sphi 0, %s143
    %s145 = sphi 0, %s143
    %s146 = sphi 0, %s145
    %s160 = sphi 0, %s146
    %s164 = sphi 0, %s164
    %s166 = sphi 0, %s164
    %s167 = sphi 0, %s166
    %s181 = sphi 0, %s167
    %s185 = sphi 0, %s185
    %s187 = sphi 0, %s185
    %s188 = sphi 0, %s187
    %s202 = sphi 0, %s188
    %s206 = sphi 0, %s206
    %s208 = sphi 0, %s206
    %s209 = sphi 0, %s208
    %s223 = sphi 0, %s209
    %s227 = sphi 0, %s227
    %s229 = sphi 0, %s227
    %s230 = sphi 0, %s229
    %s244 = sphi 0, %s230
  $region4: #{double_layer_forward.3} parent=0 // loop_header_branch
    %18 = sbr.rel (%p16) target = $region8
  $region5: #{double_layer_forward.3} parent=0 // loop_body
    %s20 = ssub.s32 %s15, 1
    %s21 = ssub.s32 %s15, 2
    %s22 = sadd.s32 %s15, 1
    %s23 = ssub.s32 %s15, %s22
    %p24 = scmp.eq.s32.totalorder %s23, 0
    %s26 = sadd.s32 %s25, 1
    %s27 = scalar_select %p24, %s25, %s26
    %p30 = pneg %p24
    %p31 = scmp.eq.s32.totalorder %s15, 2
    %p32 = por %p30, %p31
    %p33 = scmp.ne.s32.totalorder %s25, %s28
    %p34 = scmp.eq.s32.totalorder %s15, 0
    %p35 = por %p33, %p34
    %p36 = scmp.ne.s32.totalorder %s25, %s28
    %p37 = scmp.eq.s32.totalorder %s20, 2
    %p38 = por %p36, %p37
    %p39 = scmp.ne.s32.totalorder %s28, %s29
    %p40 = scmp.eq.s32.totalorder %s20, 0
    %p41 = por %p39, %p40
    %p42 = scmp.ne.s32.totalorder %s28, %s29
    %p43 = scmp.eq.s32.totalorder %s21, 2
    %p44 = por %p42, %p43
    %p46 = scmp.ne.s32.totalorder %s29, %s45
    %p47 = scmp.eq.s32.totalorder %s21, 0
    %p48 = por %p46, %p47
    %s49 = ssub.s32 %s15, %s22
    %p50 = scmp.eq.s32.totalorder %s49, 0
    %s52 = sadd.s32 %s51, 1
    %s53 = scalar_select %p50, %s51, %s52
    %p56 = pneg %p50
    %p57 = scmp.eq.s32.totalorder %s15, 2
    %p58 = por %p56, %p57
    %p59 = scmp.ne.s32.totalorder %s51, %s54
    %p60 = scmp.eq.s32.totalorder %s15, 0
    %p61 = por %p59, %p60
    %p62 = scmp.ne.s32.totalorder %s51, %s54
    %p63 = scmp.eq.s32.totalorder %s20, 2
    %p64 = por %p62, %p63
    %p65 = scmp.ne.s32.totalorder %s54, %s55
    %p66 = scmp.eq.s32.totalorder %s20, 0
    %p67 = por %p65, %p66
    %p68 = scmp.ne.s32.totalorder %s54, %s55
    %p69 = scmp.eq.s32.totalorder %s21, 2
    %p70 = por %p68, %p69
    %p72 = scmp.ne.s32.totalorder %s55, %s71
    %p73 = scmp.eq.s32.totalorder %s21, 0
    %p74 = por %p72, %p73
    %s75 = ssub.s32 %s15, %s22
    %p76 = scmp.eq.s32.totalorder %s75, 0
    %s78 = sadd.s32 %s77, 1
    %s79 = scalar_select %p76, %s77, %s78
    %p82 = pneg %p76
    %p83 = scmp.eq.s32.totalorder %s15, 2
    %p84 = por %p82, %p83
    %p85 = scmp.ne.s32.totalorder %s77, %s80
    %p86 = scmp.eq.s32.totalorder %s15, 0
    %p87 = por %p85, %p86
    %p88 = scmp.ne.s32.totalorder %s77, %s80
    %p89 = scmp.eq.s32.totalorder %s20, 2
    %p90 = por %p88, %p89
    %p91 = scmp.ne.s32.totalorder %s80, %s81
    %p92 = scmp.eq.s32.totalorder %s20, 0
    %p93 = por %p91, %p92
    %p94 = scmp.ne.s32.totalorder %s80, %s81
    %p95 = scmp.eq.s32.totalorder %s21, 2
    %p96 = por %p94, %p95
    %p98 = scmp.ne.s32.totalorder %s81, %s97
    %p99 = scmp.eq.s32.totalorder %s21, 0
    %p100 = por %p98, %p99
    %s102 = sadd.s32 %s101, 1
    %p105 = scmp.eq.s32.totalorder %s15, 2
    %p106 = scmp.ne.s32.totalorder %s101, %s103
    %p107 = scmp.eq.s32.totalorder %s15, 0
    %p108 = por %p106, %p107
    %p109 = scmp.ne.s32.totalorder %s101, %s103
    %p110 = scmp.eq.s32.totalorder %s20, 2
    %p111 = por %p109, %p110
    %p112 = scmp.ne.s32.totalorder %s103, %s104
    %p113 = scmp.eq.s32.totalorder %s20, 0
    %p114 = por %p112, %p113
    %p115 = scmp.ne.s32.totalorder %s103, %s104
    %p116 = scmp.eq.s32.totalorder %s21, 2
    %p117 = por %p115, %p116
    %p119 = scmp.ne.s32.totalorder %s104, %s118
    %p120 = scmp.eq.s32.totalorder %s21, 0
    %p121 = por %p119, %p120
    %s123 = sadd.s32 %s122, 1
    %p126 = scmp.eq.s32.totalorder %s15, 2
    %p127 = scmp.ne.s32.totalorder %s122, %s124
    %p128 = scmp.eq.s32.totalorder %s15, 0
    %p129 = por %p127, %p128
    %p130 = scmp.ne.s32.totalorder %s122, %s124
    %p131 = scmp.eq.s32.totalorder %s20, 2
    %p132 = por %p130, %p131
    %p133 = scmp.ne.s32.totalorder %s124, %s125
    %p134 = scmp.eq.s32.totalorder %s20, 0
    %p135 = por %p133, %p134
    %p136 = scmp.ne.s32.totalorder %s124, %s125
    %p137 = scmp.eq.s32.totalorder %s21, 2
    %p138 = por %p136, %p137
    %p140 = scmp.ne.s32.totalorder %s125, %s139
    %p141 = scmp.eq.s32.totalorder %s21, 0
    %p142 = por %p140, %p141
    %s144 = sadd.s32 %s143, 1
    %p147 = scmp.eq.s32.totalorder %s15, 2
    %p148 = scmp.ne.s32.totalorder %s143, %s145
    %p149 = scmp.eq.s32.totalorder %s15, 0
    %p150 = por %p148, %p149
    %p151 = scmp.ne.s32.totalorder %s143, %s145
    %p152 = scmp.eq.s32.totalorder %s20, 2
    %p153 = por %p151, %p152
    %p154 = scmp.ne.s32.totalorder %s145, %s146
    %p155 = scmp.eq.s32.totalorder %s20, 0
    %p156 = por %p154, %p155
    %p157 = scmp.ne.s32.totalorder %s145, %s146
    %p158 = scmp.eq.s32.totalorder %s21, 2
    %p159 = por %p157, %p158
    %p161 = scmp.ne.s32.totalorder %s146, %s160
    %p162 = scmp.eq.s32.totalorder %s21, 0
    %p163 = por %p161, %p162
    %s165 = sadd.s32 %s164, 1
    %p168 = scmp.eq.s32.totalorder %s15, 2
    %p169 = scmp.ne.s32.totalorder %s164, %s166
    %p170 = scmp.eq.s32.totalorder %s15, 0
    %p171 = por %p169, %p170
    %p172 = scmp.ne.s32.totalorder %s164, %s166
    %p173 = scmp.eq.s32.totalorder %s20, 2
    %p174 = por %p172, %p173
    %p175 = scmp.ne.s32.totalorder %s166, %s167
    %p176 = scmp.eq.s32.totalorder %s20, 0
    %p177 = por %p175, %p176
    %p178 = scmp.ne.s32.totalorder %s166, %s167
    %p179 = scmp.eq.s32.totalorder %s21, 2
    %p180 = por %p178, %p179
    %p182 = scmp.ne.s32.totalorder %s167, %s181
    %p183 = scmp.eq.s32.totalorder %s21, 0
    %p184 = por %p182, %p183
    %s186 = sadd.s32 %s185, 1
    %p189 = scmp.eq.s32.totalorder %s15, 2
    %p190 = scmp.ne.s32.totalorder %s185, %s187
    %p191 = scmp.eq.s32.totalorder %s15, 0
    %p192 = por %p190, %p191
    %p193 = scmp.ne.s32.totalorder %s185, %s187
    %p194 = scmp.eq.s32.totalorder %s20, 2
    %p195 = por %p193, %p194
    %p196 = scmp.ne.s32.totalorder %s187, %s188
    %p197 = scmp.eq.s32.totalorder %s20, 0
    %p198 = por %p196, %p197
    %p199 = scmp.ne.s32.totalorder %s187, %s188
    %p200 = scmp.eq.s32.totalorder %s21, 2
    %p201 = por %p199, %p200
    %p203 = scmp.ne.s32.totalorder %s188, %s202
    %p204 = scmp.eq.s32.totalorder %s21, 0
    %p205 = por %p203, %p204
    %s207 = sadd.s32 %s206, 1
    %p210 = scmp.eq.s32.totalorder %s15, 2
    %p211 = scmp.ne.s32.totalorder %s206, %s208
    %p212 = scmp.eq.s32.totalorder %s15, 0
    %p213 = por %p211, %p212
    %p214 = scmp.ne.s32.totalorder %s206, %s208
    %p215 = scmp.eq.s32.totalorder %s20, 2
    %p216 = por %p214, %p215
    %p217 = scmp.ne.s32.totalorder %s208, %s209
    %p218 = scmp.eq.s32.totalorder %s20, 0
    %p219 = por %p217, %p218
    %p220 = scmp.ne.s32.totalorder %s208, %s209
    %p221 = scmp.eq.s32.totalorder %s21, 2
    %p222 = por %p220, %p221
    %p224 = scmp.ne.s32.totalorder %s209, %s223
    %p225 = scmp.eq.s32.totalorder %s21, 0
    %p226 = por %p224, %p225
    %s228 = sadd.s32 %s227, 1
    %p231 = scmp.eq.s32.totalorder %s15, 2
    %p232 = scmp.ne.s32.totalorder %s227, %s229
    %p233 = scmp.eq.s32.totalorder %s15, 0
    %p234 = por %p232, %p233
    %p235 = scmp.ne.s32.totalorder %s227, %s229
    %p236 = scmp.eq.s32.totalorder %s20, 2
    %p237 = por %p235, %p236
    %p238 = scmp.ne.s32.totalorder %s229, %s230
    %p239 = scmp.eq.s32.totalorder %s20, 0
    %p240 = por %p238, %p239
    %p241 = scmp.ne.s32.totalorder %s229, %s230
    %p242 = scmp.eq.s32.totalorder %s21, 2
    %p243 = por %p241, %p242
    %p245 = scmp.ne.s32.totalorder %s230, %s244
    %p246 = scmp.eq.s32.totalorder %s21, 0
    %p247 = por %p245, %p246
    %p248 = scmp.le.s32.totalorder 1, %s15
    %p249 = scmp.lt.s32.totalorder %s15, 4
    %p250 = pnand %p248, %p249
    %p251 = pneg %p250
    // Predicated region
    $region9: #{double_layer_forward.3} parent=5 // pred_check
      _
    $region10: #{double_layer_forward.3} parent=5 // pred_check_branch
      %253 = sbr.rel (%p250) target = $region12
    $region11: #{double_layer_forward.3} parent=5 // pred_region
      %s254 = ssub.s32 %s15, 1
      // Predicated region
      $region13: #{double_layer_forward.3} parent=11 // pred_check
        %p255 = pneg %p114
      $region14: #{double_layer_forward.3} parent=11 // pred_check_branch
        %257 = sbr.rel (%p255) target = $region16
      $region15: #{double_layer_forward.3} parent=11 // pred_region
        _
      $region16: #{double_layer_forward.3} parent=11 // pred_fallthru
        _
      // Predicated region
      $region17: #{double_layer_forward.3} parent=11 // pred_check
        %p258 = pneg %p135
      $region18: #{double_layer_forward.3} parent=11 // pred_check_branch
        %260 = sbr.rel (%p258) target = $region20
      $region19: #{double_layer_forward.3} parent=11 // pred_region
        _
      $region20: #{double_layer_forward.3} parent=11 // pred_fallthru
        _
      // Predicated region
      $region21: #{double_layer_forward.3} parent=11 // pred_check
        %p261 = pneg %p156
      $region22: #{double_layer_forward.3} parent=11 // pred_check_branch
        %263 = sbr.rel (%p261) target = $region24
      $region23: #{double_layer_forward.3} parent=11 // pred_region
        _
      $region24: #{double_layer_forward.3} parent=11 // pred_fallthru
        _
      // Predicated region
      $region25: #{double_layer_forward.3} parent=11 // pred_check
        %p264 = pneg %p177
      $region26: #{double_layer_forward.3} parent=11 // pred_check_branch
        %266 = sbr.rel (%p264) target = $region28
      $region27: #{double_layer_forward.3} parent=11 // pred_region
        _
      $region28: #{double_layer_forward.3} parent=11 // pred_fallthru
        _
      // Predicated region
      $region29: #{double_layer_forward.3} parent=11 // pred_check
        %p267 = pneg %p198
      $region30: #{double_layer_forward.3} parent=11 // pred_check_branch
        %269 = sbr.rel (%p267) target = $region32
      $region31: #{double_layer_forward.3} parent=11 // pred_region
        _
      $region32: #{double_layer_forward.3} parent=11 // pred_fallthru
        _
      // Predicated region
      $region33: #{double_layer_forward.3} parent=11 // pred_check
        %p270 = pneg %p219
      $region34: #{double_layer_forward.3} parent=11 // pred_check_branch
        %272 = sbr.rel (%p270) target = $region36
      $region35: #{double_layer_forward.3} parent=11 // pred_region
        _
      $region36: #{double_layer_forward.3} parent=11 // pred_fallthru
        _
    $region12: #{double_layer_forward.3} parent=5 // pred_fallthru
      _
    %p273 = scmp.lt.s32.totalorder %s15, 3
    // Predicated region
    $region37: #{double_layer_forward.3} parent=5 // pred_check
      %p274 = pneg %p273
    $region38: #{double_layer_forward.3} parent=5 // pred_check_branch
      %276 = sbr.rel (%p274) target = $region40
    $region39: #{double_layer_forward.3} parent=5 // pred_region
      // Predicated region
      $region41: #{double_layer_forward.3} parent=39 // pred_check
        %p277 = pneg %p35
      $region42: #{double_layer_forward.3} parent=39 // pred_check_branch
        %279 = sbr.rel (%p277) target = $region44
      $region43: #{double_layer_forward.3} parent=39 // pred_region
        %p280 = scmp.lt.s32.totalorder %s15, 2
        %s281 = scalar_select %p280, %s15, 2
        %s282 = smul.addr %s281, 2
        %s283 = smul.addr %s282, 8
        %s284 = scalar_lea.vmem %s0, %s283
      $region44: #{double_layer_forward.3} parent=39 // pred_fallthru
        _
      // Predicated region
      $region45: #{double_layer_forward.3} parent=39 // pred_check
        %p285 = pneg %p61
      $region46: #{double_layer_forward.3} parent=39 // pred_check_branch
        %287 = sbr.rel (%p285) target = $region48
      $region47: #{double_layer_forward.3} parent=39 // pred_region
        %p288 = scmp.lt.s32.totalorder %s15, 2
        %s289 = scalar_select %p288, %s15, 2
        %s290 = smul.addr %s289, 2
        %s291 = smul.addr %s290, 8
        %s292 = scalar_lea.vmem %s1, %s291
      $region48: #{double_layer_forward.3} parent=39 // pred_fallthru
        _
      // Predicated region
      $region49: #{double_layer_forward.3} parent=39 // pred_check
        %p293 = pneg %p87
      $region50: #{double_layer_forward.3} parent=39 // pred_check_branch
        %295 = sbr.rel (%p293) target = $region52
      $region51: #{double_layer_forward.3} parent=39 // pred_region
        %p296 = scmp.lt.s32.totalorder %s15, 2
        %s297 = scalar_select %p296, %s15, 2
        %s298 = smul.addr %s297, 4
        %s299 = smul.addr %s298, 8
        %s300 = scalar_lea.vmem %s2, %s299
      $region52: #{double_layer_forward.3} parent=39 // pred_fallthru
        _
    $region40: #{double_layer_forward.3} parent=5 // pred_fallthru
      _
    %p301 = scmp.le.s32.totalorder 1, %s15
    %p302 = scmp.lt.s32.totalorder %s15, 4
    %p303 = pnand %p301, %p302
    %p304 = pneg %p303
    // Predicated region
    $region53: #{double_layer_forward.3} parent=5 // pred_check
      _
    $region54: #{double_layer_forward.3} parent=5 // pred_check_branch
      %306 = sbr.rel (%p303) target = $region56
    $region55: #{double_layer_forward.3} parent=5 // pred_region
      %s307 = ssub.s32 %s15, 1
      %p308 = scmp.lt.s32.totalorder %s20, 2
      %s309 = scalar_select %p308, %s20, 2
      %s310 = smul.addr %s309, 2
      %s311 = smul.addr %s310, 8
      %s312 = scalar_lea.vmem %s0, %s311
      %p313 = pneg %p41
      %p314 = pneg %p38
      %p315 = scmp.lt.s32.totalorder %s20, 2
      %s316 = scalar_select %p315, %s20, 2
      %s317 = smul.addr %s316, 2
      %s318 = smul.addr %s317, 8
      %s319 = scalar_lea.vmem %s1, %s318
      %p320 = pneg %p67
      %p321 = pneg %p64
      %p322 = scmp.lt.s32.totalorder %s20, 2
      %s323 = scalar_select %p322, %s20, 2
      %s324 = smul.addr %s323, 4
      %s325 = smul.addr %s324, 8
      %s326 = scalar_lea.vmem %s2, %s325
      %p327 = pneg %p93
      %p328 = pneg %p90
      %p329 = pneg %p114
      %p330 = pneg %p111
      %p331 = pneg %p135
      %p332 = pneg %p132
      %p333 = pneg %p156
      %p334 = pneg %p153
      %p335 = pneg %p177
      %p336 = pneg %p174
      %p337 = pneg %p198
      %p338 = pneg %p195
      %p339 = pneg %p219
      %p340 = pneg %p216
      %p341 = pneg %p240
      %p342 = pneg %p237
      %p343 = scmp.lt.s32.totalorder %s20, 2
      %s344 = scalar_select %p343, %s20, 2
      %s345 = smul.addr %s344, 2
      %s346 = smul.addr %s345, 8
      %s347 = scalar_lea.vmem %s0, %s346
      %p348 = scmp.lt.s32.totalorder %s20, 2
      %s349 = scalar_select %p348, %s20, 2
      %s350 = smul.addr %s349, 2
      %s351 = smul.addr %s350, 8
      %s352 = scalar_lea.vmem %s1, %s351
      %p353 = scmp.lt.s32.totalorder %s20, 2
      %s354 = scalar_select %p353, %s20, 2
      %s355 = smul.addr %s354, 4
      %s356 = smul.addr %s355, 8
      %s357 = scalar_lea.vmem %s2, %s356
      %p358 = scmp.eq.s32.totalorder %s20, 0
      // Predicated region
      $region57: #{double_layer_forward.3} parent=55 // pred_check
        %p359 = pneg %p358
      $region58: #{double_layer_forward.3} parent=55 // pred_check_branch
        %361 = sbr.rel (%p359) target = $region60
      $region59: #{double_layer_forward.3} parent=55 // pred_region
        %v362 = vld [vmem:[%s4] sm:$0xff]
        %v363 = vld [vmem:[%s4 + $0x8] sm:$0xff]
        %vm364 = vcmask 64512
        %365 = vst.msk [vmem:[#allocation2] sm:$0xff] %vm364, %v362
        %366 = vst.msk [vmem:[#allocation2 + $0x8] sm:$0xff] %vm364, %v363
      $region60: #{double_layer_forward.3} parent=55 // pred_fallthru
        _
      %v367 = vld [vmem:[%s357] sm:$0xff]
      %v368 = vld [vmem:[%s357 + $0x8] sm:$0xff]
      %v369 = vld [vmem:[%s357 + $0x10] sm:$0xff]
      %v370 = vld [vmem:[%s357 + $0x18] sm:$0xff]
      %v371 = vld [vmem:[%s3] sm:$0xff]
      %v372 = vld [vmem:[%s3 + $0x8] sm:$0xff]
      %v373 = vld [vmem:[%s3 + $0x10] sm:$0xff]
      %v374 = vld [vmem:[%s3 + $0x18] sm:$0xff]
      %vm375 = vcmask 261120
      %v377 = vsel %vm375, %v371, 0
      %v380 = vsel %vm375, %v372, 0
      %v383 = vsel %vm375, %v373, 0
      %v386 = vsel %vm375, %v374, 0
      %388 = vmatprep.subr.mxu0 0.0
      %389 = vmatpush1.msra.mxu0 0.0
      %390 = vmatprep.subr.mxu0 0.0
      %391 = vmatpush1.msra.mxu0 0.0
      %392 = vmatprep.subr.mxu0 0.0
      %393 = vmatpush1.msra.mxu0 0.0
      %394 = vmatprep.subr.mxu0 0.0
      %395 = vmatpush1.msra.mxu0 0.0
      %396 = vmatprep.subr.mxu0 0.0
      %397 = vmatpush1.msra.mxu0 0.0
      %398 = vmatprep.subr.mxu0 0.0
      %399 = vmatpush1.msra.mxu0 0.0
      %400 = vmatprep.subr.mxu0 0.0
      %401 = vmatpush1.msra.mxu0 0.0
      %402 = vmatprep.subr.mxu0 0.0
      %403 = vmatpush1.msra.mxu0 0.0
      %404 = vmatprep.subr.mxu0 0.0
      %405 = vmatpush1.msra.mxu0 0.0
      %406 = vmatprep.subr.mxu0 0.0
      %407 = vmatpush1.msra.mxu0 0.0
      %408 = vmatprep.subr.mxu0 0.0
      %409 = vmatpush1.msra.mxu0 0.0
      %410 = vmatprep.subr.mxu0 0.0
      %411 = vmatpush1.msra.mxu0 0.0
      %412 = vmatprep.subr.mxu0 0.0
      %413 = vmatpush1.msra.mxu0 %v370
      %414 = vmatprep.subr.mxu0 0.0
      %415 = vmatpush1.msra.mxu0 %v369
      %416 = vmatprep.subr.mxu0 0.0
      %417 = vmatpush1.msra.mxu0 %v368
      %418 = vmatprep.subr.mxu0 0.0
      %419 = vmatpush1.msra.mxu0 %v367
      %420 = vmatprep.subr.mxu0 0.0
      %421 = vmatpush2.msra.mxu0 0.0
      %422 = vmatprep.subr.mxu0 0.0
      %423 = vmatpush2.msra.mxu0 0.0
      %424 = vmatprep.subr.mxu0 0.0
      %425 = vmatpush2.msra.mxu0 0.0
      %426 = vmatprep.subr.mxu0 0.0
      %427 = vmatpush2.msra.mxu0 0.0
      %428 = vmatprep.subr.mxu0 0.0
      %429 = vmatpush2.msra.mxu0 0.0
      %430 = vmatprep.subr.mxu0 0.0
      %431 = vmatpush2.msra.mxu0 0.0
      %432 = vmatprep.subr.mxu0 0.0
      %433 = vmatpush2.msra.mxu0 0.0
      %434 = vmatprep.subr.mxu0 0.0
      %435 = vmatpush2.msra.mxu0 0.0
      %436 = vmatprep.subr.mxu0 0.0
      %437 = vmatpush2.msra.mxu0 0.0
      %438 = vmatprep.subr.mxu0 0.0
      %439 = vmatpush2.msra.mxu0 0.0
      %440 = vmatprep.subr.mxu0 0.0
      %441 = vmatpush2.msra.mxu0 0.0
      %442 = vmatprep.subr.mxu0 0.0
      %443 = vmatpush2.msra.mxu0 0.0
      %444 = vmatprep.subr.mxu0 0.0
      %445 = vmatpush2.msra.mxu0 0.0
      %446 = vmatprep.subr.mxu0 0.0
      %447 = vmatpush2.msra.mxu0 0.0
      %448 = vmatprep.subr.mxu0 0.0
      %449 = vmatpush2.msra.mxu0 0.0
      %450 = vmatprep.subr.mxu0 0.0
      %451 = vmatpush2.msra.mxu0 0.0
      %452 = vmatprep.mubr.f32.mxu0 0.0
      %453 = vmatmul.mubr.f32.gmra.mxu0 %v377
      %v454 = vpop.f32.mrf.mxu0
      %v455 = vadd.f32 0.0, %v454
      %v456 = vpop.f32.mrf.mxu0
      %457 = vmatprep.mubr.f32.mxu0 0.0
      %458 = vmatmul.mubr.f32.gmra.mxu0 %v380
      %v459 = vpop.f32.mrf.mxu0
      %v460 = vadd.f32 0.0, %v459
      %v461 = vpop.f32.mrf.mxu0
      %462 = vmatprep.mubr.f32.mxu0 0.0
      %463 = vmatmul.mubr.f32.gmra.mxu0 %v383
      %v464 = vpop.f32.mrf.mxu0
      %v465 = vadd.f32 0.0, %v464
      %v466 = vpop.f32.mrf.mxu0
      %467 = vmatprep.mubr.f32.mxu0 0.0
      %468 = vmatmul.mubr.f32.gmra.mxu0 %v386
      %v469 = vpop.f32.mrf.mxu0
      %v470 = vadd.f32 0.0, %v469
      %v471 = vpop.f32.mrf.mxu0
      %472 = vdwg.mxu0
      %v473 = vlaneseq
      %v474 = vand.u32 %v473, 127
      %v475 = vld [vmem:[%s347] sm:$0xff]
      %v476 = vld [vmem:[%s347 + $0x8] sm:$0xff]
      %477 = vset.pattern.permute.xlu0 0
      %478 = vperm.xlu0 %477, %v475
      %v479 = vpop.permute.xlu0 %478
      %480 = vset.pattern.permute.xlu0 0
      %481 = vperm.xlu0 %480, %v476
      %v482 = vpop.permute.xlu0 %481
      %vm483 = vcmp.eq.s32.totalorder %v474, %v479
      %vm484 = vcmp.eq.s32.totalorder %v474, %v482
      %v485 = vld [vmem:[%s352] sm:$0xff]
      %v486 = vld [vmem:[%s352 + $0x8] sm:$0xff]
      %488 = vset.pattern.permute.xlu0 0
      %489 = vperm.xlu0 %488, %v485
      %v490 = vpop.permute.xlu0 %489
      %493 = vset.pattern.permute.xlu0 0
      %494 = vperm.xlu0 %493, %v486
      %v495 = vpop.permute.xlu0 %494
      %v497 = vsel %vm483, %v490, 0.0
      %v498 = vsel %vm484, %v495, 0.0
      %v500 = vsel %vm375, %v497, 0
      %v503 = vsel %vm375, %v498, 0
      %505 = vmatprep.subr.mxu0 0.0
      %506 = vmatpush1.msra.mxu0 0.0
      %507 = vmatprep.subr.mxu0 0.0
      %508 = vmatpush1.msra.mxu0 0.0
      %509 = vmatprep.subr.mxu0 0.0
      %510 = vmatpush1.msra.mxu0 0.0
      %511 = vmatprep.subr.mxu0 0.0
      %512 = vmatpush1.msra.mxu0 0.0
      %513 = vmatprep.subr.mxu0 0.0
      %514 = vmatpush1.msra.mxu0 0.0
      %515 = vmatprep.subr.mxu0 0.0
      %516 = vmatpush1.msra.mxu0 0.0
      %517 = vmatprep.subr.mxu0 0.0
      %518 = vmatpush1.msra.mxu0 0.0
      %519 = vmatprep.subr.mxu0 0.0
      %520 = vmatpush1.msra.mxu0 0.0
      %521 = vmatprep.subr.mxu0 0.0
      %522 = vmatpush1.msra.mxu0 0.0
      %523 = vmatprep.subr.mxu0 0.0
      %524 = vmatpush1.msra.mxu0 0.0
      %525 = vmatprep.subr.mxu0 0.0
      %526 = vmatpush1.msra.mxu0 0.0
      %527 = vmatprep.subr.mxu0 0.0
      %528 = vmatpush1.msra.mxu0 0.0
      %529 = vmatprep.subr.mxu0 0.0
      %530 = vmatpush1.msra.mxu0 %v370
      %531 = vmatprep.subr.mxu0 0.0
      %532 = vmatpush1.msra.mxu0 %v369
      %533 = vmatprep.subr.mxu0 0.0
      %534 = vmatpush1.msra.mxu0 %v368
      %535 = vmatprep.subr.mxu0 0.0
      %536 = vmatpush1.msra.mxu0 %v367
      %537 = vmatprep.subr.mxu0 0.0
      %538 = vmatpush2.msra.mxu0 0.0
      %539 = vmatprep.subr.mxu0 0.0
      %540 = vmatpush2.msra.mxu0 0.0
      %541 = vmatprep.subr.mxu0 0.0
      %542 = vmatpush2.msra.mxu0 0.0
      %543 = vmatprep.subr.mxu0 0.0
      %544 = vmatpush2.msra.mxu0 0.0
      %545 = vmatprep.subr.mxu0 0.0
      %546 = vmatpush2.msra.mxu0 0.0
      %547 = vmatprep.subr.mxu0 0.0
      %548 = vmatpush2.msra.mxu0 0.0
      %549 = vmatprep.subr.mxu0 0.0
      %550 = vmatpush2.msra.mxu0 0.0
      %551 = vmatprep.subr.mxu0 0.0
      %552 = vmatpush2.msra.mxu0 0.0
      %553 = vmatprep.subr.mxu0 0.0
      %554 = vmatpush2.msra.mxu0 0.0
      %555 = vmatprep.subr.mxu0 0.0
      %556 = vmatpush2.msra.mxu0 0.0
      %557 = vmatprep.subr.mxu0 0.0
      %558 = vmatpush2.msra.mxu0 0.0
      %559 = vmatprep.subr.mxu0 0.0
      %560 = vmatpush2.msra.mxu0 0.0
      %561 = vmatprep.subr.mxu0 0.0
      %562 = vmatpush2.msra.mxu0 0.0
      %563 = vmatprep.subr.mxu0 0.0
      %564 = vmatpush2.msra.mxu0 0.0
      %565 = vmatprep.subr.mxu0 0.0
      %566 = vmatpush2.msra.mxu0 0.0
      %567 = vmatprep.subr.mxu0 0.0
      %568 = vmatpush2.msra.mxu0 0.0
      %569 = vmatprep.mubr.f32.mxu0 0.0
      %570 = vmatmul.mubr.f32.gmra.mxu0 %v500
      %v571 = vpop.f32.mrf.mxu0
      %v572 = vadd.f32 0.0, %v571
      %v573 = vpop.f32.mrf.mxu0
      %574 = vmatprep.mubr.f32.mxu0 0.0
      %575 = vmatmul.mubr.f32.gmra.mxu0 %v503
      %v576 = vpop.f32.mrf.mxu0
      %v577 = vadd.f32 0.0, %v576
      %v578 = vpop.f32.mrf.mxu0
      %579 = vdwg.mxu0
      %v580 = vld [vmem:[#allocation2] sm:$0xff]
      %v581 = vld [vmem:[#allocation2 + $0x8] sm:$0xff]
      %v582 = vld [vmem:[%s5] sm:$0xff]
      %v583 = vld [vmem:[%s5 + $0x8] sm:$0xff]
      %v584 = vld [vmem:[%s7] sm:$0x1]
      %v586 = vlaneseq
      %v587 = vshrl.u32 %v586, 7
      %v588 = vsub.s32 0, %v587
      %v589 = vrot.slane %v584, %v588
      %vm591 = vcmask 130048
      %v593 = vsel %vm591, %v572, 0
      %v596 = vsel %vm591, %v577, 0
      %598 = vmatprep.subr.mxu0 0.0
      %599 = vmatpush1.msra.mxu0 0.0
      %600 = vmatprep.subr.mxu0 0.0
      %601 = vmatpush1.msra.mxu0 0.0
      %602 = vmatprep.subr.mxu0 0.0
      %603 = vmatpush1.msra.mxu0 0.0
      %604 = vmatprep.subr.mxu0 0.0
      %605 = vmatpush1.msra.mxu0 0.0
      %606 = vmatprep.subr.mxu0 0.0
      %607 = vmatpush1.msra.mxu0 0.0
      %608 = vmatprep.subr.mxu0 0.0
      %609 = vmatpush1.msra.mxu0 0.0
      %610 = vmatprep.subr.mxu0 0.0
      %611 = vmatpush1.msra.mxu0 0.0
      %612 = vmatprep.subr.mxu0 0.0
      %613 = vmatpush1.msra.mxu0 0.0
      %614 = vmatprep.subr.mxu0 0.0
      %615 = vmatpush1.msra.mxu0 0.0
      %616 = vmatprep.subr.mxu0 0.0
      %617 = vmatpush1.msra.mxu0 0.0
      %618 = vmatprep.subr.mxu0 0.0
      %619 = vmatpush1.msra.mxu0 0.0
      %620 = vmatprep.subr.mxu0 0.0
      %621 = vmatpush1.msra.mxu0 0.0
      %622 = vmatprep.subr.mxu0 0.0
      %623 = vmatpush1.msra.mxu0 0.0
      %624 = vmatprep.subr.mxu0 0.0
      %625 = vmatpush1.msra.mxu0 0.0
      %626 = vmatprep.subr.mxu0 0.0
      %627 = vmatpush1.msra.mxu0 %v583
      %628 = vmatprep.subr.mxu0 0.0
      %629 = vmatpush1.msra.mxu0 %v582
      %630 = vmatprep.subr.mxu0 0.0
      %631 = vmatpush2.msra.mxu0 0.0
      %632 = vmatprep.subr.mxu0 0.0
      %633 = vmatpush2.msra.mxu0 0.0
      %634 = vmatprep.subr.mxu0 0.0
      %635 = vmatpush2.msra.mxu0 0.0
      %636 = vmatprep.subr.mxu0 0.0
      %637 = vmatpush2.msra.mxu0 0.0
      %638 = vmatprep.subr.mxu0 0.0
      %639 = vmatpush2.msra.mxu0 0.0
      %640 = vmatprep.subr.mxu0 0.0
      %641 = vmatpush2.msra.mxu0 0.0
      %642 = vmatprep.subr.mxu0 0.0
      %643 = vmatpush2.msra.mxu0 0.0
      %644 = vmatprep.subr.mxu0 0.0
      %645 = vmatpush2.msra.mxu0 0.0
      %646 = vmatprep.subr.mxu0 0.0
      %647 = vmatpush2.msra.mxu0 0.0
      %648 = vmatprep.subr.mxu0 0.0
      %649 = vmatpush2.msra.mxu0 0.0
      %650 = vmatprep.subr.mxu0 0.0
      %651 = vmatpush2.msra.mxu0 0.0
      %652 = vmatprep.subr.mxu0 0.0
      %653 = vmatpush2.msra.mxu0 0.0
      %654 = vmatprep.subr.mxu0 0.0
      %655 = vmatpush2.msra.mxu0 0.0
      %656 = vmatprep.subr.mxu0 0.0
      %657 = vmatpush2.msra.mxu0 0.0
      %658 = vmatprep.subr.mxu0 0.0
      %659 = vmatpush2.msra.mxu0 0.0
      %660 = vmatprep.subr.mxu0 0.0
      %661 = vmatpush2.msra.mxu0 0.0
      %662 = vmatprep.mubr.f32.mxu0 0.0
      %663 = vmatmul.mubr.f32.gmra.mxu0 %v593
      %v664 = vpop.f32.mrf.mxu0
      %v665 = vadd.f32 %v589, %v664
      %v666 = vpop.f32.mrf.mxu0
      %667 = vmatprep.mubr.f32.mxu0 0.0
      %668 = vmatmul.mubr.f32.gmra.mxu0 %v596
      %v669 = vpop.f32.mrf.mxu0
      %v670 = vadd.f32 %v589, %v669
      %v671 = vpop.f32.mrf.mxu0
      %672 = vdwg.mxu0
      %v673 = vld [vmem:[%s6] sm:$0xff]
      %v674 = vld [vmem:[%s8] sm:$0x1]
      %v676 = vlaneseq
      %v677 = vshrl.u32 %v676, 7
      %v678 = vsub.s32 0, %v677
      %v679 = vrot.slane %v674, %v678
      %vm681 = vcmask 64512
      %v683 = vsel %vm681, %v580, 0
      %v686 = vsel %vm681, %v581, 0
      %688 = vmatprep.subr.mxu0 0.0
      %689 = vmatpush1.msra.mxu0 0.0
      %690 = vmatprep.subr.mxu0 0.0
      %691 = vmatpush1.msra.mxu0 0.0
      %692 = vmatprep.subr.mxu0 0.0
      %693 = vmatpush1.msra.mxu0 0.0
      %694 = vmatprep.subr.mxu0 0.0
      %695 = vmatpush1.msra.mxu0 0.0
      %696 = vmatprep.subr.mxu0 0.0
      %697 = vmatpush1.msra.mxu0 0.0
      %698 = vmatprep.subr.mxu0 0.0
      %699 = vmatpush1.msra.mxu0 0.0
      %700 = vmatprep.subr.mxu0 0.0
      %701 = vmatpush1.msra.mxu0 0.0
      %702 = vmatprep.subr.mxu0 0.0
      %703 = vmatpush1.msra.mxu0 0.0
      %704 = vmatprep.subr.mxu0 0.0
      %705 = vmatpush1.msra.mxu0 0.0
      %706 = vmatprep.subr.mxu0 0.0
      %707 = vmatpush1.msra.mxu0 0.0
      %708 = vmatprep.subr.mxu0 0.0
      %709 = vmatpush1.msra.mxu0 0.0
      %710 = vmatprep.subr.mxu0 0.0
      %711 = vmatpush1.msra.mxu0 0.0
      %712 = vmatprep.subr.mxu0 0.0
      %713 = vmatpush1.msra.mxu0 0.0
      %714 = vmatprep.subr.mxu0 0.0
      %715 = vmatpush1.msra.mxu0 0.0
      %716 = vmatprep.subr.mxu0 0.0
      %717 = vmatpush1.msra.mxu0 0.0
      %718 = vmatprep.subr.mxu0 0.0
      %719 = vmatpush1.msra.mxu0 %v673
      %720 = vmatprep.subr.mxu0 0.0
      %721 = vmatpush2.msra.mxu0 0.0
      %722 = vmatprep.subr.mxu0 0.0
      %723 = vmatpush2.msra.mxu0 0.0
      %724 = vmatprep.subr.mxu0 0.0
      %725 = vmatpush2.msra.mxu0 0.0
      %726 = vmatprep.subr.mxu0 0.0
      %727 = vmatpush2.msra.mxu0 0.0
      %728 = vmatprep.subr.mxu0 0.0
      %729 = vmatpush2.msra.mxu0 0.0
      %730 = vmatprep.subr.mxu0 0.0
      %731 = vmatpush2.msra.mxu0 0.0
      %732 = vmatprep.subr.mxu0 0.0
      %733 = vmatpush2.msra.mxu0 0.0
      %734 = vmatprep.subr.mxu0 0.0
      %735 = vmatpush2.msra.mxu0 0.0
      %736 = vmatprep.subr.mxu0 0.0
      %737 = vmatpush2.msra.mxu0 0.0
      %738 = vmatprep.subr.mxu0 0.0
      %739 = vmatpush2.msra.mxu0 0.0
      %740 = vmatprep.subr.mxu0 0.0
      %741 = vmatpush2.msra.mxu0 0.0
      %742 = vmatprep.subr.mxu0 0.0
      %743 = vmatpush2.msra.mxu0 0.0
      %744 = vmatprep.subr.mxu0 0.0
      %745 = vmatpush2.msra.mxu0 0.0
      %746 = vmatprep.subr.mxu0 0.0
      %747 = vmatpush2.msra.mxu0 0.0
      %748 = vmatprep.subr.mxu0 0.0
      %749 = vmatpush2.msra.mxu0 0.0
      %750 = vmatprep.subr.mxu0 0.0
      %751 = vmatpush2.msra.mxu0 0.0
      %752 = vmatprep.mubr.f32.mxu0 0.0
      %753 = vmatmul.mubr.f32.gmra.mxu0 %v683
      %v754 = vpop.f32.mrf.mxu0
      %v755 = vadd.f32 %v679, %v754
      %v756 = vpop.f32.mrf.mxu0
      %757 = vmatprep.mubr.f32.mxu0 0.0
      %758 = vmatmul.mubr.f32.gmra.mxu0 %v686
      %v759 = vpop.f32.mrf.mxu0
      %v760 = vadd.f32 %v679, %v759
      %v761 = vpop.f32.mrf.mxu0
      %762 = vdwg.mxu0
      %s763 = scalar_lea.vmem %s5, 16
      %v764 = vld [vmem:[%s763] sm:$0xff]
      %v765 = vld [vmem:[%s763 + $0x8] sm:$0xff]
      %s766 = scalar_lea.vmem %s7, 1
      %v767 = vld [vmem:[%s766] sm:$0x1]
      %v769 = vlaneseq
      %v770 = vshrl.u32 %v769, 7
      %v771 = vsub.s32 0, %v770
      %v772 = vrot.slane %v767, %v771
      %774 = vmatprep.subr.mxu0 0.0
      %775 = vmatpush1.msra.mxu0 0.0
      %776 = vmatprep.subr.mxu0 0.0
      %777 = vmatpush1.msra.mxu0 0.0
      %778 = vmatprep.subr.mxu0 0.0
      %779 = vmatpush1.msra.mxu0 0.0
      %780 = vmatprep.subr.mxu0 0.0
      %781 = vmatpush1.msra.mxu0 0.0
      %782 = vmatprep.subr.mxu0 0.0
      %783 = vmatpush1.msra.mxu0 0.0
      %784 = vmatprep.subr.mxu0 0.0
      %785 = vmatpush1.msra.mxu0 0.0
      %786 = vmatprep.subr.mxu0 0.0
      %787 = vmatpush1.msra.mxu0 0.0
      %788 = vmatprep.subr.mxu0 0.0
      %789 = vmatpush1.msra.mxu0 0.0
      %790 = vmatprep.subr.mxu0 0.0
      %791 = vmatpush1.msra.mxu0 0.0
      %792 = vmatprep.subr.mxu0 0.0
      %793 = vmatpush1.msra.mxu0 0.0
      %794 = vmatprep.subr.mxu0 0.0
      %795 = vmatpush1.msra.mxu0 0.0
      %796 = vmatprep.subr.mxu0 0.0
      %797 = vmatpush1.msra.mxu0 0.0
      %798 = vmatprep.subr.mxu0 0.0
      %799 = vmatpush1.msra.mxu0 0.0
      %800 = vmatprep.subr.mxu0 0.0
      %801 = vmatpush1.msra.mxu0 0.0
      %802 = vmatprep.subr.mxu0 0.0
      %803 = vmatpush1.msra.mxu0 %v765
      %804 = vmatprep.subr.mxu0 0.0
      %805 = vmatpush1.msra.mxu0 %v764
      %806 = vmatprep.subr.mxu0 0.0
      %807 = vmatpush2.msra.mxu0 0.0
      %808 = vmatprep.subr.mxu0 0.0
      %809 = vmatpush2.msra.mxu0 0.0
      %810 = vmatprep.subr.mxu0 0.0
      %811 = vmatpush2.msra.mxu0 0.0
      %812 = vmatprep.subr.mxu0 0.0
      %813 = vmatpush2.msra.mxu0 0.0
      %814 = vmatprep.subr.mxu0 0.0
      %815 = vmatpush2.msra.mxu0 0.0
      %816 = vmatprep.subr.mxu0 0.0
      %817 = vmatpush2.msra.mxu0 0.0
      %818 = vmatprep.subr.mxu0 0.0
      %819 = vmatpush2.msra.mxu0 0.0
      %820 = vmatprep.subr.mxu0 0.0
      %821 = vmatpush2.msra.mxu0 0.0
      %822 = vmatprep.subr.mxu0 0.0
      %823 = vmatpush2.msra.mxu0 0.0
      %824 = vmatprep.subr.mxu0 0.0
      %825 = vmatpush2.msra.mxu0 0.0
      %826 = vmatprep.subr.mxu0 0.0
      %827 = vmatpush2.msra.mxu0 0.0
      %828 = vmatprep.subr.mxu0 0.0
      %829 = vmatpush2.msra.mxu0 0.0
      %830 = vmatprep.subr.mxu0 0.0
      %831 = vmatpush2.msra.mxu0 0.0
      %832 = vmatprep.subr.mxu0 0.0
      %833 = vmatpush2.msra.mxu0 0.0
      %834 = vmatprep.subr.mxu0 0.0
      %835 = vmatpush2.msra.mxu0 0.0
      %836 = vmatprep.subr.mxu0 0.0
      %837 = vmatpush2.msra.mxu0 0.0
      %838 = vmatprep.mubr.f32.mxu0 0.0
      %839 = vmatmul.mubr.f32.gmra.mxu0 %v593
      %v840 = vpop.f32.mrf.mxu0
      %v841 = vadd.f32 %v772, %v840
      %v842 = vpop.f32.mrf.mxu0
      %843 = vmatprep.mubr.f32.mxu0 0.0
      %844 = vmatmul.mubr.f32.gmra.mxu0 %v596
      %v845 = vpop.f32.mrf.mxu0
      %v846 = vadd.f32 %v772, %v845
      %v847 = vpop.f32.mrf.mxu0
      %848 = vdwg.mxu0
      %s849 = scalar_lea.vmem %s6, 8
      %v850 = vld [vmem:[%s849] sm:$0xff]
      %s851 = scalar_lea.vmem %s8, 1
      %v852 = vld [vmem:[%s851] sm:$0x1]
      %v854 = vlaneseq
      %v855 = vshrl.u32 %v854, 7
      %v856 = vsub.s32 0, %v855
      %v857 = vrot.slane %v852, %v856
      %859 = vmatprep.subr.mxu0 0.0
      %860 = vmatpush1.msra.mxu0 0.0
      %861 = vmatprep.subr.mxu0 0.0
      %862 = vmatpush1.msra.mxu0 0.0
      %863 = vmatprep.subr.mxu0 0.0
      %864 = vmatpush1.msra.mxu0 0.0
      %865 = vmatprep.subr.mxu0 0.0
      %866 = vmatpush1.msra.mxu0 0.0
      %867 = vmatprep.subr.mxu0 0.0
      %868 = vmatpush1.msra.mxu0 0.0
      %869 = vmatprep.subr.mxu0 0.0
      %870 = vmatpush1.msra.mxu0 0.0
      %871 = vmatprep.subr.mxu0 0.0
      %872 = vmatpush1.msra.mxu0 0.0
      %873 = vmatprep.subr.mxu0 0.0
      %874 = vmatpush1.msra.mxu0 0.0
      %875 = vmatprep.subr.mxu0 0.0
      %876 = vmatpush1.msra.mxu0 0.0
      %877 = vmatprep.subr.mxu0 0.0
      %878 = vmatpush1.msra.mxu0 0.0
      %879 = vmatprep.subr.mxu0 0.0
      %880 = vmatpush1.msra.mxu0 0.0
      %881 = vmatprep.subr.mxu0 0.0
      %882 = vmatpush1.msra.mxu0 0.0
      %883 = vmatprep.subr.mxu0 0.0
      %884 = vmatpush1.msra.mxu0 0.0
      %885 = vmatprep.subr.mxu0 0.0
      %886 = vmatpush1.msra.mxu0 0.0
      %887 = vmatprep.subr.mxu0 0.0
      %888 = vmatpush1.msra.mxu0 0.0
      %889 = vmatprep.subr.mxu0 0.0
      %890 = vmatpush1.msra.mxu0 %v850
      %891 = vmatprep.subr.mxu0 0.0
      %892 = vmatpush2.msra.mxu0 0.0
      %893 = vmatprep.subr.mxu0 0.0
      %894 = vmatpush2.msra.mxu0 0.0
      %895 = vmatprep.subr.mxu0 0.0
      %896 = vmatpush2.msra.mxu0 0.0
      %897 = vmatprep.subr.mxu0 0.0
      %898 = vmatpush2.msra.mxu0 0.0
      %899 = vmatprep.subr.mxu0 0.0
      %900 = vmatpush2.msra.mxu0 0.0
      %901 = vmatprep.subr.mxu0 0.0
      %902 = vmatpush2.msra.mxu0 0.0
      %903 = vmatprep.subr.mxu0 0.0
      %904 = vmatpush2.msra.mxu0 0.0
      %905 = vmatprep.subr.mxu0 0.0
      %906 = vmatpush2.msra.mxu0 0.0
      %907 = vmatprep.subr.mxu0 0.0
      %908 = vmatpush2.msra.mxu0 0.0
      %909 = vmatprep.subr.mxu0 0.0
      %910 = vmatpush2.msra.mxu0 0.0
      %911 = vmatprep.subr.mxu0 0.0
      %912 = vmatpush2.msra.mxu0 0.0
      %913 = vmatprep.subr.mxu0 0.0
      %914 = vmatpush2.msra.mxu0 0.0
      %915 = vmatprep.subr.mxu0 0.0
      %916 = vmatpush2.msra.mxu0 0.0
      %917 = vmatprep.subr.mxu0 0.0
      %918 = vmatpush2.msra.mxu0 0.0
      %919 = vmatprep.subr.mxu0 0.0
      %920 = vmatpush2.msra.mxu0 0.0
      %921 = vmatprep.subr.mxu0 0.0
      %922 = vmatpush2.msra.mxu0 0.0
      %923 = vmatprep.mubr.f32.mxu0 0.0
      %924 = vmatmul.mubr.f32.gmra.mxu0 %v683
      %v925 = vpop.f32.mrf.mxu0
      %v926 = vadd.f32 %v857, %v925
      %v927 = vpop.f32.mrf.mxu0
      %928 = vmatprep.mubr.f32.mxu0 0.0
      %929 = vmatmul.mubr.f32.gmra.mxu0 %v686
      %v930 = vpop.f32.mrf.mxu0
      %v931 = vadd.f32 %v857, %v930
      %v932 = vpop.f32.mrf.mxu0
      %933 = vdwg.mxu0
      %s934 = scalar_lea.vmem %s5, 32
      %v935 = vld [vmem:[%s934] sm:$0xff]
      %v936 = vld [vmem:[%s934 + $0x8] sm:$0xff]
      %s937 = scalar_lea.vmem %s7, 2
      %v938 = vld [vmem:[%s937] sm:$0x1]
      %v940 = vlaneseq
      %v941 = vshrl.u32 %v940, 7
      %v942 = vsub.s32 0, %v941
      %v943 = vrot.slane %v938, %v942
      %945 = vmatprep.subr.mxu0 0.0
      %946 = vmatpush1.msra.mxu0 0.0
      %947 = vmatprep.subr.mxu0 0.0
      %948 = vmatpush1.msra.mxu0 0.0
      %949 = vmatprep.subr.mxu0 0.0
      %950 = vmatpush1.msra.mxu0 0.0
      %951 = vmatprep.subr.mxu0 0.0
      %952 = vmatpush1.msra.mxu0 0.0
      %953 = vmatprep.subr.mxu0 0.0
      %954 = vmatpush1.msra.mxu0 0.0
      %955 = vmatprep.subr.mxu0 0.0
      %956 = vmatpush1.msra.mxu0 0.0
      %957 = vmatprep.subr.mxu0 0.0
      %958 = vmatpush1.msra.mxu0 0.0
      %959 = vmatprep.subr.mxu0 0.0
      %960 = vmatpush1.msra.mxu0 0.0
      %961 = vmatprep.subr.mxu0 0.0
      %962 = vmatpush1.msra.mxu0 0.0
      %963 = vmatprep.subr.mxu0 0.0
      %964 = vmatpush1.msra.mxu0 0.0
      %965 = vmatprep.subr.mxu0 0.0
      %966 = vmatpush1.msra.mxu0 0.0
      %967 = vmatprep.subr.mxu0 0.0
      %968 = vmatpush1.msra.mxu0 0.0
      %969 = vmatprep.subr.mxu0 0.0
      %970 = vmatpush1.msra.mxu0 0.0
      %971 = vmatprep.subr.mxu0 0.0
      %972 = vmatpush1.msra.mxu0 0.0
      %973 = vmatprep.subr.mxu0 0.0
      %974 = vmatpush1.msra.mxu0 %v936
      %975 = vmatprep.subr.mxu0 0.0
      %976 = vmatpush1.msra.mxu0 %v935
      %977 = vmatprep.subr.mxu0 0.0
      %978 = vmatpush2.msra.mxu0 0.0
      %979 = vmatprep.subr.mxu0 0.0
      %980 = vmatpush2.msra.mxu0 0.0
      %981 = vmatprep.subr.mxu0 0.0
      %982 = vmatpush2.msra.mxu0 0.0
      %983 = vmatprep.subr.mxu0 0.0
      %984 = vmatpush2.msra.mxu0 0.0
      %985 = vmatprep.subr.mxu0 0.0
      %986 = vmatpush2.msra.mxu0 0.0
      %987 = vmatprep.subr.mxu0 0.0
      %988 = vmatpush2.msra.mxu0 0.0
      %989 = vmatprep.subr.mxu0 0.0
      %990 = vmatpush2.msra.mxu0 0.0
      %991 = vmatprep.subr.mxu0 0.0
      %992 = vmatpush2.msra.mxu0 0.0
      %993 = vmatprep.subr.mxu0 0.0
      %994 = vmatpush2.msra.mxu0 0.0
      %995 = vmatprep.subr.mxu0 0.0
      %996 = vmatpush2.msra.mxu0 0.0
      %997 = vmatprep.subr.mxu0 0.0
      %998 = vmatpush2.msra.mxu0 0.0
      %999 = vmatprep.subr.mxu0 0.0
      %1000 = vmatpush2.msra.mxu0 0.0
      %1001 = vmatprep.subr.mxu0 0.0
      %1002 = vmatpush2.msra.mxu0 0.0
      %1003 = vmatprep.subr.mxu0 0.0
      %1004 = vmatpush2.msra.mxu0 0.0
      %1005 = vmatprep.subr.mxu0 0.0
      %1006 = vmatpush2.msra.mxu0 0.0
      %1007 = vmatprep.subr.mxu0 0.0
      %1008 = vmatpush2.msra.mxu0 0.0
      %1009 = vmatprep.mubr.f32.mxu0 0.0
      %1010 = vmatmul.mubr.f32.gmra.mxu0 %v593
      %v1011 = vpop.f32.mrf.mxu0
      %v1012 = vadd.f32 %v943, %v1011
      %v1013 = vpop.f32.mrf.mxu0
      %1014 = vmatprep.mubr.f32.mxu0 0.0
      %1015 = vmatmul.mubr.f32.gmra.mxu0 %v596
      %v1016 = vpop.f32.mrf.mxu0
      %v1017 = vadd.f32 %v943, %v1016
      %v1018 = vpop.f32.mrf.mxu0
      %1019 = vdwg.mxu0
      %s1020 = scalar_lea.vmem %s6, 16
      %v1021 = vld [vmem:[%s1020] sm:$0xff]
      %s1022 = scalar_lea.vmem %s8, 2
      %v1023 = vld [vmem:[%s1022] sm:$0x1]
      %v1025 = vlaneseq
      %v1026 = vshrl.u32 %v1025, 7
      %v1027 = vsub.s32 0, %v1026
      %v1028 = vrot.slane %v1023, %v1027
      %1030 = vmatprep.subr.mxu0 0.0
      %1031 = vmatpush1.msra.mxu0 0.0
      %1032 = vmatprep.subr.mxu0 0.0
      %1033 = vmatpush1.msra.mxu0 0.0
      %1034 = vmatprep.subr.mxu0 0.0
      %1035 = vmatpush1.msra.mxu0 0.0
      %1036 = vmatprep.subr.mxu0 0.0
      %1037 = vmatpush1.msra.mxu0 0.0
      %1038 = vmatprep.subr.mxu0 0.0
      %1039 = vmatpush1.msra.mxu0 0.0
      %1040 = vmatprep.subr.mxu0 0.0
      %1041 = vmatpush1.msra.mxu0 0.0
      %1042 = vmatprep.subr.mxu0 0.0
      %1043 = vmatpush1.msra.mxu0 0.0
      %1044 = vmatprep.subr.mxu0 0.0
      %1045 = vmatpush1.msra.mxu0 0.0
      %1046 = vmatprep.subr.mxu0 0.0
      %1047 = vmatpush1.msra.mxu0 0.0
      %1048 = vmatprep.subr.mxu0 0.0
      %1049 = vmatpush1.msra.mxu0 0.0
      %1050 = vmatprep.subr.mxu0 0.0
      %1051 = vmatpush1.msra.mxu0 0.0
      %1052 = vmatprep.subr.mxu0 0.0
      %1053 = vmatpush1.msra.mxu0 0.0
      %1054 = vmatprep.subr.mxu0 0.0
      %1055 = vmatpush1.msra.mxu0 0.0
      %1056 = vmatprep.subr.mxu0 0.0
      %1057 = vmatpush1.msra.mxu0 0.0
      %1058 = vmatprep.subr.mxu0 0.0
      %1059 = vmatpush1.msra.mxu0 0.0
      %1060 = vmatprep.subr.mxu0 0.0
      %1061 = vmatpush1.msra.mxu0 %v1021
      %1062 = vmatprep.subr.mxu0 0.0
      %1063 = vmatpush2.msra.mxu0 0.0
      %1064 = vmatprep.subr.mxu0 0.0
      %1065 = vmatpush2.msra.mxu0 0.0
      %1066 = vmatprep.subr.mxu0 0.0
      %1067 = vmatpush2.msra.mxu0 0.0
      %1068 = vmatprep.subr.mxu0 0.0
      %1069 = vmatpush2.msra.mxu0 0.0
      %1070 = vmatprep.subr.mxu0 0.0
      %1071 = vmatpush2.msra.mxu0 0.0
      %1072 = vmatprep.subr.mxu0 0.0
      %1073 = vmatpush2.msra.mxu0 0.0
      %1074 = vmatprep.subr.mxu0 0.0
      %1075 = vmatpush2.msra.mxu0 0.0
      %1076 = vmatprep.subr.mxu0 0.0
      %1077 = vmatpush2.msra.mxu0 0.0
      %1078 = vmatprep.subr.mxu0 0.0
      %1079 = vmatpush2.msra.mxu0 0.0
      %1080 = vmatprep.subr.mxu0 0.0
      %1081 = vmatpush2.msra.mxu0 0.0
      %1082 = vmatprep.subr.mxu0 0.0
      %1083 = vmatpush2.msra.mxu0 0.0
      %1084 = vmatprep.subr.mxu0 0.0
      %1085 = vmatpush2.msra.mxu0 0.0
      %1086 = vmatprep.subr.mxu0 0.0
      %1087 = vmatpush2.msra.mxu0 0.0
      %1088 = vmatprep.subr.mxu0 0.0
      %1089 = vmatpush2.msra.mxu0 0.0
      %1090 = vmatprep.subr.mxu0 0.0
      %1091 = vmatpush2.msra.mxu0 0.0
      %1092 = vmatprep.subr.mxu0 0.0
      %1093 = vmatpush2.msra.mxu0 0.0
      %1094 = vmatprep.mubr.f32.mxu0 0.0
      %1095 = vmatmul.mubr.f32.gmra.mxu0 %v683
      %v1096 = vpop.f32.mrf.mxu0
      %v1097 = vadd.f32 %v1028, %v1096
      %v1098 = vpop.f32.mrf.mxu0
      %1099 = vmatprep.mubr.f32.mxu0 0.0
      %1100 = vmatmul.mubr.f32.gmra.mxu0 %v686
      %v1101 = vpop.f32.mrf.mxu0
      %v1102 = vadd.f32 %v1028, %v1101
      %v1103 = vpop.f32.mrf.mxu0
      %1104 = vdwg.mxu0
      %v1105 = vadd.f32 %v665, %v755
      %v1106 = vadd.f32 %v670, %v760
      %v1107 = vxor.u32 %v1105, 2147483648
      %v1108 = vxor.u32 %v1106, 2147483648
      %v1109 = vmul.f32 %v1107, 1.442695
      %v1110 = vpow.pop %v1109
      %v1111 = vmul.f32 %v1108, 1.442695
      %v1112 = vpow.pop %v1111
      %v1113 = vadd.f32 %v1110, 1.0
      %v1114 = vadd.f32 %v1112, 1.0
      %v1115 = vrcp.pop %v1113
      %v1116 = vmul.f32 1.0, %v1115
      %v1117 = vrcp.pop %v1114
      %v1118 = vmul.f32 1.0, %v1117
      %v1119 = vadd.f32 %v841, %v926
      %v1120 = vadd.f32 %v846, %v931
      %v1121 = vxor.u32 %v1119, 2147483648
      %v1122 = vxor.u32 %v1120, 2147483648
      %v1123 = vmul.f32 %v1121, 1.442695
      %v1124 = vpow.pop %v1123
      %v1125 = vmul.f32 %v1122, 1.442695
      %v1126 = vpow.pop %v1125
      %v1127 = vadd.f32 %v1124, 1.0
      %v1128 = vadd.f32 %v1126, 1.0
      %v1129 = vrcp.pop %v1127
      %v1130 = vmul.f32 1.0, %v1129
      %v1131 = vrcp.pop %v1128
      %v1132 = vmul.f32 1.0, %v1131
      %v1133 = vmul.f32 %v1116, %v1097
      %v1134 = vmul.f32 %v1118, %v1102
      %v1135 = vadd.f32 %v1012, %v1133
      %v1136 = vadd.f32 %v1017, %v1134
      %v1137 = vtanh.pop %v1135
      %v1138 = vtanh.pop %v1136
      %v1139 = vsub.f32 1.0, %v1130
      %v1140 = vsub.f32 1.0, %v1132
      %v1141 = vmul.f32 %v1139, %v1137
      %v1142 = vmul.f32 %v1140, %v1138
      %v1143 = vmul.f32 %v1130, %v580
      %v1144 = vmul.f32 %v1132, %v581
      %v1145 = vadd.f32 %v1141, %v1143
      %v1146 = vadd.f32 %v1142, %v1144
      %1147 = vst.msk [vmem:[#allocation2] sm:$0xff] %vm681, %v1145
      %1148 = vst.msk [vmem:[#allocation2 + $0x8] sm:$0xff] %vm681, %v1146
      %v1150 = vsel %vm591, %v455, 0
      %v1153 = vsel %vm591, %v460, 0
      %v1156 = vsel %vm591, %v465, 0
      %v1159 = vsel %vm591, %v470, 0
      %1161 = vmatprep.subr.mxu0 0.0
      %1162 = vmatpush1.msra.mxu0 0.0
      %1163 = vmatprep.subr.mxu0 0.0
      %1164 = vmatpush1.msra.mxu0 0.0
      %1165 = vmatprep.subr.mxu0 0.0
      %1166 = vmatpush1.msra.mxu0 0.0
      %1167 = vmatprep.subr.mxu0 0.0
      %1168 = vmatpush1.msra.mxu0 0.0
      %1169 = vmatprep.subr.mxu0 0.0
      %1170 = vmatpush1.msra.mxu0 0.0
      %1171 = vmatprep.subr.mxu0 0.0
      %1172 = vmatpush1.msra.mxu0 0.0
      %1173 = vmatprep.subr.mxu0 0.0
      %1174 = vmatpush1.msra.mxu0 0.0
      %1175 = vmatprep.subr.mxu0 0.0
      %1176 = vmatpush1.msra.mxu0 0.0
      %1177 = vmatprep.subr.mxu0 0.0
      %1178 = vmatpush1.msra.mxu0 0.0
      %1179 = vmatprep.subr.mxu0 0.0
      %1180 = vmatpush1.msra.mxu0 0.0
      %1181 = vmatprep.subr.mxu0 0.0
      %1182 = vmatpush1.msra.mxu0 0.0
      %1183 = vmatprep.subr.mxu0 0.0
      %1184 = vmatpush1.msra.mxu0 0.0
      %1185 = vmatprep.subr.mxu0 0.0
      %1186 = vmatpush1.msra.mxu0 0.0
      %1187 = vmatprep.subr.mxu0 0.0
      %1188 = vmatpush1.msra.mxu0 0.0
      %1189 = vmatprep.subr.mxu0 0.0
      %1190 = vmatpush1.msra.mxu0 %v1146
      %1191 = vmatprep.subr.mxu0 0.0
      %1192 = vmatpush1.msra.mxu0 %v1145
      %1193 = vmatprep.subr.mxu0 0.0
      %1194 = vmatpush2.msra.mxu0 0.0
      %1195 = vmatprep.subr.mxu0 0.0
      %1196 = vmatpush2.msra.mxu0 0.0
      %1197 = vmatprep.subr.mxu0 0.0
      %1198 = vmatpush2.msra.mxu0 0.0
      %1199 = vmatprep.subr.mxu0 0.0
      %1200 = vmatpush2.msra.mxu0 0.0
      %1201 = vmatprep.subr.mxu0 0.0
      %1202 = vmatpush2.msra.mxu0 0.0
      %1203 = vmatprep.subr.mxu0 0.0
      %1204 = vmatpush2.msra.mxu0 0.0
      %1205 = vmatprep.subr.mxu0 0.0
      %1206 = vmatpush2.msra.mxu0 0.0
      %1207 = vmatprep.subr.mxu0 0.0
      %1208 = vmatpush2.msra.mxu0 0.0
      %1209 = vmatprep.subr.mxu0 0.0
      %1210 = vmatpush2.msra.mxu0 0.0
      %1211 = vmatprep.subr.mxu0 0.0
      %1212 = vmatpush2.msra.mxu0 0.0
      %1213 = vmatprep.subr.mxu0 0.0
      %1214 = vmatpush2.msra.mxu0 0.0
      %1215 = vmatprep.subr.mxu0 0.0
      %1216 = vmatpush2.msra.mxu0 0.0
      %1217 = vmatprep.subr.mxu0 0.0
      %1218 = vmatpush2.msra.mxu0 0.0
      %1219 = vmatprep.subr.mxu0 0.0
      %1220 = vmatpush2.msra.mxu0 0.0
      %1221 = vmatprep.subr.mxu0 0.0
      %1222 = vmatpush2.msra.mxu0 0.0
      %1223 = vmatprep.subr.mxu0 0.0
      %1224 = vmatpush2.msra.mxu0 0.0
      %1225 = vmatprep.mubr.f32.mxu0 0.0
      %1226 = vmatmul.mubr.f32.gmra.mxu0 %v1150
      %v1227 = vpop.f32.mrf.mxu0
      %v1228 = vadd.f32 0.0, %v1227
      %v1229 = vpop.f32.mrf.mxu0
      %1230 = vmatprep.mubr.f32.mxu0 0.0
      %1231 = vmatmul.mubr.f32.gmra.mxu0 %v1153
      %v1232 = vpop.f32.mrf.mxu0
      %v1233 = vadd.f32 0.0, %v1232
      %v1234 = vpop.f32.mrf.mxu0
      %1235 = vmatprep.mubr.f32.mxu0 0.0
      %1236 = vmatmul.mubr.f32.gmra.mxu0 %v1156
      %v1237 = vpop.f32.mrf.mxu0
      %v1238 = vadd.f32 0.0, %v1237
      %v1239 = vpop.f32.mrf.mxu0
      %1240 = vmatprep.mubr.f32.mxu0 0.0
      %1241 = vmatmul.mubr.f32.gmra.mxu0 %v1159
      %v1242 = vpop.f32.mrf.mxu0
      %v1243 = vadd.f32 0.0, %v1242
      %v1244 = vpop.f32.mrf.mxu0
      %1245 = vdwg.mxu0
      %1246 = vst.msk [vmem:[%s9] sm:$0xff] %vm681, %v1228
      %1247 = vst.msk [vmem:[%s9 + $0x8] sm:$0xff] %vm681, %v1233
      %1248 = vst.msk [vmem:[%s9 + $0x10] sm:$0xff] %vm681, %v1238
      %1249 = vst.msk [vmem:[%s9 + $0x18] sm:$0xff] %vm681, %v1243
      // Predicated region
      $region61: #{double_layer_forward.3} parent=55 // pred_check
        %p1250 = pneg %p237
      $region62: #{double_layer_forward.3} parent=55 // pred_check_branch
        %1252 = sbr.rel (%p1250) target = $region64
      $region63: #{double_layer_forward.3} parent=55 // pred_region
        _
      $region64: #{double_layer_forward.3} parent=55 // pred_fallthru
        _
      // Predicated region
      $region65: #{double_layer_forward.3} parent=55 // pred_check
        %p1253 = pneg %p237
      $region66: #{double_layer_forward.3} parent=55 // pred_check_branch
        %1255 = sbr.rel (%p1253) target = $region68
      $region67: #{double_layer_forward.3} parent=55 // pred_region
        _
      $region68: #{double_layer_forward.3} parent=55 // pred_fallthru
        _
    $region56: #{double_layer_forward.3} parent=5 // pred_fallthru
      _
    %p1256 = scmp.le.s32.totalorder 2, %s15
    // Predicated region
    $region69: #{double_layer_forward.3} parent=5 // pred_check
      %p1257 = pneg %p1256
    $region70: #{double_layer_forward.3} parent=5 // pred_check_branch
      %1259 = sbr.rel (%p1257) target = $region72
    $region71: #{double_layer_forward.3} parent=5 // pred_region
      %s1260 = ssub.s32 %s15, 2
    $region72: #{double_layer_forward.3} parent=5 // pred_fallthru
      _
  $region6: #{double_layer_forward.3} parent=0 // loop_footer
    %s19 = sadd.s32 1, %s15
  $region7: #{double_layer_forward.3} parent=0 // loop_footer_branch
    %14 = sbr.rel target = $region3
  $region8: #{double_layer_forward.3} parent=0 // loop_exit
    _

</llo_original>
